<compile_context>
chip_gen: v5e
topology: v5e:2x2
jax: 0.10.0
libtpu: 0.0.40
codegen_flags: <defaults>
</compile_context>

<pallas_src>
from functools import partial

import numpy as np
import jax
import jax.numpy as jnp
from jax import lax
from jax.experimental import pallas as pl
from jax.experimental.pallas import tpu as pltpu


def _round_up(x, m):
    return (x + m - 1) // m * m


# ----------------------------------------------------------------------------- kernel
def _rpn_kernel(xm_ref, xh1_ref, xh2_ref, wk_ref, b1_ref, wd_ref, bd_ref, dec_ref,
                prop_ref, *, th, wp, stride):
    # xm_ref : (th*wp, C3)  bf16  kx-shifted padded rows for this block (rows = h_loc*wp + w)
    # xh1_ref: (wp,   C3)  bf16  next padded feature row (halo +1)
    # xh2_ref: (wp,   C3)  bf16  next+1 padded feature row (halo +2)
    # wk_ref : (3, C3, 256) bf16  3x3-conv weight, ky-major, lanes kx*Cin+c (zero-padded to C3)
    # b1_ref : (1, 256)     f32   conv bias
    # wd_ref : (256, OUTL)  bf16  fused bbox-delta weight, lane o = a*5 + c
    # bd_ref : (1, OUTL)    f32   bbox-delta bias with the anchor angle folded into comp 4
    # dec_ref: (4, OUTL)    f32   rows: [w,h,w,h,1] multiplier, cx-select, cy-select, exp-select
    # prop_ref:(th*wp, OUTL) f32  decoded proposals
    rb = th * wp
    xm = xm_ref[...]
    xh1 = xh1_ref[...]
    xh2 = xh2_ref[...]

    # 3x3 conv = 3 accumulating (rows, 3*Cin) x (3*Cin, 256) dots over ky row shifts.
    t = jnp.dot(xm, wk_ref[0], preferred_element_type=jnp.float32)

    lhs1 = jnp.concatenate([xm[wp:], xh1], axis=0) if th >= 2 else xh1
    t = t + jnp.dot(lhs1, wk_ref[1], preferred_element_type=jnp.float32)

    if th >= 3:
        lhs2 = jnp.concatenate([xm[2 * wp:], xh1, xh2], axis=0)
    elif th == 2:
        lhs2 = jnp.concatenate([xh1, xh2], axis=0)
    else:
        lhs2 = xh2
    t = t + jnp.dot(lhs2, wk_ref[2], preferred_element_type=jnp.float32)

    t = jnp.maximum(t + b1_ref[...], 0.0)                       # ReLU(conv3x3 + b)

    # Fused 1x1 bbox-delta conv; bias already carries the anchor angle on comp 4.
    d = jnp.dot(t.astype(jnp.bfloat16), wd_ref[...],
                preferred_element_type=jnp.float32) + bd_ref[...]

    mul = dec_ref[0:1, :]            # [w, h, w, h, 1] per anchor
    selx = dec_ref[1:2, :]           # 1 on the cx lane (comp 0)
    sely = dec_ref[2:3, :]           # 1 on the cy lane (comp 1)
    is_exp = dec_ref[3:4, :] > 0.5   # comps 2, 3
    d = jnp.where(is_exp, jnp.exp(d), d)

    # Anchor centers synthesized from the row index: no per-row constant stream.
    # float floor-div is exact here: th <= ~512, wp <= ~4096 (see wrapper comment).
    i = lax.broadcasted_iota(jnp.int32, (rb, 1), 0).astype(jnp.float32)
    h_loc = jnp.floor(i * (1.0 / wp) + 1e-4)
    w_loc = i - h_loc * wp
    h0 = (pl.program_id(1) * th).astype(jnp.float32)
    cx = w_loc * stride
    cy = (h_loc + h0) * stride

    prop_ref[...] = d * mul + cx * selx + cy * sely


# ----------------------------------------------------------------------------- anchors
def _anchor_components(H, W, stride, A):
    """cx, cy per spatial cell (HW,) and base anchors (A, 3) = [w, h, angle]."""
    scales = [32.0, 64.0, 128.0]
    ratios = [0.5, 1.0, 2.0]
    angles = [0.0, 45.0, 90.0]
    base = []
    for s in scales:
        for r in ratios:
            w_ = s * r ** 0.5
            h_ = s / r ** 0.5
            for ang in angles:
                base.append([w_, h_, ang])
    base = jnp.asarray(base, jnp.float32)                       # (A, 3)
    assert base.shape[0] == A
    cx = jnp.broadcast_to(jnp.arange(W, dtype=jnp.float32)[None, :] * stride, (H, W)).reshape(-1)
    cy = jnp.broadcast_to(jnp.arange(H, dtype=jnp.float32)[:, None] * stride, (H, W)).reshape(-1)
    return cx, cy, base


# ----------------------------------------------------------------------------- tiling
def _vmem_bytes(th, wp, c3, outl):
    rb = th * wp
    outl_pad = _round_up(outl, 128)
    bf, f4 = 2, 4
    stream = 2 * rb * c3 * bf + 2 * 2 * wp * c3 * bf + 2 * rb * outl_pad * f4
    resident = 3 * c3 * 256 * bf + 256 * outl_pad * bf + 16 * outl_pad * f4 + 8 * 256 * f4
    temps = rb * 256 * (f4 + bf) + 2 * rb * outl_pad * f4 + 2 * rb * c3 * bf + rb * 128 * f4
    return stream + resident + temps


def _choose_row_block(H, wp, c3, outl, B, budget_bytes, max_rows):
    """Largest th | H with th*wp rows fitting the VMEM budget and >=2 grid points."""
    for th in sorted((t for t in range(1, H + 1) if H % t == 0), reverse=True):
        if th * wp > max_rows:
            continue
        est = _vmem_bytes(th, wp, c3, outl)
        if est > budget_bytes:
            continue
        if B * (H // th) < 2 and th > 1:      # keep both v7x TensorCores busy when possible
            continue
        return th, est
    return 1, _vmem_bytes(1, wp, c3, outl)    # always-correct fallback


# ----------------------------------------------------------------------------- wrapper
def oriented_rpn_forward(x_nchw, params, num_anchors=27, stride=32,
                         max_rows_per_block=4096,
                         vmem_budget_bytes=20 * 2 ** 20,
                         pad_output_lanes=False):
    B, Cin, H, W = x_nchw.shape
    A = num_anchors
    Wp = _round_up(max(W, 8), 8)            # halo blocks are Wp rows -> needs Wp % 8 == 0
    C3 = _round_up(3 * Cin, 128)            # lane-dense contraction dim (item 8)
    OUT5 = 5 * A
    OUTL = _round_up(OUT5, 128) if pad_output_lanes else OUT5

    # --- glue: NCHW -> NHWC, SAME pad, kx-shift only (3x, not 9x im2col), bf16 for the MXU
    x = jnp.transpose(x_nchw, (0, 2, 3, 1)).astype(jnp.float32)
    xpad = jnp.pad(x, ((0, 0), (1, 1), (1, 1 + Wp - W), (0, 0)))        # (B, H+2, Wp+2, Cin)
    xk = jnp.concatenate([xpad[:, :, kx:kx + Wp, :] for kx in range(3)], axis=-1)
    xk = xk.reshape(B, (H + 2) * Wp, 3 * Cin)
    xk = jnp.pad(xk, ((0, 0), (0, 0), (0, C3 - 3 * Cin))).astype(jnp.bfloat16)

    # --- parameters: ky-major conv weight slabs, fused delta weight, angle folded into bias
    wk = params["w1"].reshape(3, 3 * Cin, 256)                          # (ky, kx*Cin+c, 256)
    wk = jnp.pad(wk, ((0, 0), (0, C3 - 3 * Cin), (0, 0))).astype(jnp.bfloat16)
    b1 = params["b1"].reshape(1, 256).astype(jnp.float32)

    _, _, base = _anchor_components(H, W, stride, A)                    # (A, 3) = [w, h, angle]
    wd = params["wd"].reshape(256, OUT5).astype(jnp.float32)
    bd = params["bd"].reshape(A, 5).astype(jnp.float32)
    bdp = bd.at[:, 4].add(base[:, 2]).reshape(1, OUT5)                  # fold anchor angle (item 1)

    ones = jnp.ones((A,), jnp.float32)
    zeros = jnp.zeros((A,), jnp.float32)
    mul = jnp.stack([base[:, 0], base[:, 1], base[:, 0], base[:, 1], ones], axis=1).reshape(1, OUT5)
    selx = jnp.stack([ones, zeros, zeros, zeros, zeros], axis=1).reshape(1, OUT5)
    sely = jnp.stack([zeros, ones, zeros, zeros, zeros], axis=1).reshape(1, OUT5)
    esel = jnp.stack([zeros, zeros, ones, ones, zeros], axis=1).reshape(1, OUT5)
    dec = jnp.concatenate([mul, selx, sely, esel], axis=0)              # (4, 5A) resident consts

    if OUTL != OUT5:                                                    # v7x lane padding (item 6)
        padc = OUTL - OUT5
        wd = jnp.pad(wd, ((0, 0), (0, padc)))
        bdp = jnp.pad(bdp, ((0, 0), (0, padc)))
        dec = jnp.pad(dec, ((0, 0), (0, padc)))
    wd = wd.astype(jnp.bfloat16)
    bdp = bdp.astype(jnp.float32)
    dec = dec.astype(jnp.float32)

    th, est = _choose_row_block(H, Wp, C3, OUTL, B, vmem_budget_bytes, max_rows_per_block)
    RB = th * Wp
    R = H // th

    kern = partial(_rpn_kernel, th=th, wp=Wp, stride=float(stride))

    grid_spec = pltpu.PrefetchScalarGridSpec(
        num_scalar_prefetch=0,
        grid=(B, R),
        in_specs=[
            # Same HBM array seen three times: the main row block plus two
            # one-feature-row halo blocks (ky=1, ky=2 shifts).  If xprof ever
            # shows exposed DMA at small blocks, add pipeline_mode=pl.Buffered(3)
            # on the first spec and the out_spec (item 9).
            pl.BlockSpec((None, RB, C3), lambda b, r: (b, r, 0)),
            pl.BlockSpec((None, Wp, C3), lambda b, r: (b, (r + 1) * th, 0)),
            pl.BlockSpec((None, Wp, C3), lambda b, r: (b, (r + 1) * th + 1, 0)),
            pl.BlockSpec((3, C3, 256), lambda b, r: (0, 0, 0)),     # conv weight (resident)
            pl.BlockSpec((1, 256), lambda b, r: (0, 0)),            # conv bias
            pl.BlockSpec((256, OUTL), lambda b, r: (0, 0)),         # fused delta weight
            pl.BlockSpec((1, OUTL), lambda b, r: (0, 0)),           # delta bias (+angle)
            pl.BlockSpec((4, OUTL), lambda b, r: (0, 0)),           # decode constants
        ],
        out_specs=pl.BlockSpec((None, RB, OUTL), lambda b, r: (b, r, 0)),
    )

    flops = 2 * B * H * Wp * (3 * C3 * 256 + 256 * OUTL)
    bytes_accessed = int(xk.size) * 2 + int(wk.size) * 2 + 256 * OUTL * 2 + B * H * Wp * OUTL * 4
    cost = pl.CostEstimate(flops=int(flops),
                           transcendentals=int(B * H * Wp * OUTL),
                           bytes_accessed=int(bytes_accessed))

    vmem_limit = int(min(max(2 * est, 24 << 20), 48 << 20))            # items 3/4

    prop = pl.pallas_call(
        kern,
        out_shape=jax.ShapeDtypeStruct((B, H * Wp, OUTL), jnp.float32),
        grid_spec=grid_spec,
        compiler_params=pltpu.CompilerParams(
            dimension_semantics=("parallel", "parallel"),
            vmem_limit_bytes=vmem_limit),
        cost_estimate=cost,
    )(xk, xk, xk, wk, b1, wd, bdp, dec)

    # lane order j = a*5 + c; drop padded lanes / padded columns, giving rows
    # (h*W + w)*A + a x 5 components -- exactly the PyTorch output layout.
    prop = prop[..., :OUT5].reshape(B, H, Wp, A, 5)[:, :, :W].reshape(B, H * W * A, 5)
    return [prop[b] for b in range(B)]


# ----------------------------------------------------------------------------- reference
def reference_forward(x_nchw, params, num_anchors=27, stride=32):
    """Pure-JAX f32 reference mirroring the PyTorch module semantics exactly."""
    B, Cin, H, W = x_nchw.shape
    A = num_anchors
    HW = H * W
    hp = lax.Precision.HIGHEST
    t = lax.conv_general_dilated(
        x_nchw.astype(jnp.float32), params["w1"], (1, 1), "SAME",
        dimension_numbers=("NCHW", "HWIO", "NCHW"), precision=hp)
    t = jnp.maximum(t + params["b1"].reshape(1, 256, 1, 1), 0.0)
    deltas = lax.conv_general_dilated(
        t, params["wd"].reshape(1, 1, 256, 5 * A), (1, 1), "VALID",
        dimension_numbers=("NCHW", "HWIO", "NCHW"), precision=hp)
    deltas = deltas + params["bd"].reshape(1, 5 * A, 1, 1)
    deltas = deltas.reshape(B, A, 5, H, W).transpose(0, 3, 4, 1, 2).reshape(B, -1, 5)

    cx, cy, base = _anchor_components(H, W, stride, A)
    shifts = jnp.stack([cx, cy], axis=-1)                               # (HW, 2)
    anchors = jnp.concatenate(
        [jnp.broadcast_to(shifts[:, None, :], (HW, A, 2)),
         jnp.broadcast_to(base[None, :, :], (HW, A, 3))], axis=-1).reshape(HW * A, 5)
    acx, acy, aw, ah, ang = (anchors[:, 0], anchors[:, 1], anchors[:, 2],
                             anchors[:, 3], anchors[:, 4])
    out = []
    for b in range(B):
        d = deltas[b]
        dx, dy, dw, dh, da = d[:, 0], d[:, 1], d[:, 2], d[:, 3], d[:, 4]
        out.append(jnp.stack([dx * aw + acx, dy * ah + acy,
                              jnp.exp(dw) * aw, jnp.exp(dh) * ah, ang + da], axis=1))
    return out


# ----------------------------------------------------------------------------- test
if __name__ == "__main__":
    B, Cin, H, W = 2, 4, 16, 16
    A, STRIDE = 27, 32

    key = jax.random.PRNGKey(0)
    k1, k2, k3, k4, k5, k6, kx = jax.random.split(key, 7)
    params = {
        "w1": 0.05 * jax.random.normal(k1, (3, 3, Cin, 256), jnp.float32),   # HWIO
        "b1": 0.01 * jax.random.normal(k2, (256,), jnp.float32),
        # obj_logits params exist in the module but feed a dead branch of forward();
        # kept for parameter-set fidelity, never passed to the kernel.
        "wl": 0.05 * jax.random.normal(k3, (256, A), jnp.float32),
        "bl": 0.01 * jax.random.normal(k4, (A,), jnp.float32),
        "wd": 0.02 * jax.random.normal(k5, (256, 5 * A), jnp.float32),       # (in, out), o = a*5+c
        "bd": 0.01 * jax.random.normal(k6, (5 * A,), jnp.float32),
    }
    x = jax.random.normal(kx, (B, Cin, H, W), jnp.float32)

    ref = reference_forward(x, params, num_anchors=A, stride=STRIDE)

    # Exercise all static kernel configurations on the toy map:
    #   th=4 multi-block grid, th=16 single block with the v7x-style 256-lane padded
    #   output, and the th=2 / th=1 halo-only paths.
    configs = [
        dict(max_rows_per_block=64),
        dict(max_rows_per_block=4096, pad_output_lanes=True),
        dict(max_rows_per_block=32),
        dict(max_rows_per_block=16),
    ]
    for cfg in configs:
        got = oriented_rpn_forward(x, params, num_anchors=A, stride=STRIDE, **cfg)
        got = [jax.block_until_ready(p) for p in got]
        for g, want in zip(got, ref):
            assert g.shape == (H * W * A, 5)
            # bf16 MXU inputs vs f32 reference -> loose tolerance (flagged in review).
            np.testing.assert_allclose(np.asarray(g), np.asarray(want), rtol=2e-2, atol=0.5)

    print("KERNEL_OK")
</pallas_src>

<mosaic_0001>
module attributes {stable_mosaic.version = 11 : i64} {
  func.func @_rpn_kernel(%arg0: i32, %arg1: i32, %arg2: memref<1x64x128xbf16, #tpu.memory_space<vmem>>, %arg3: memref<1x16x128xbf16, #tpu.memory_space<vmem>>, %arg4: memref<1x16x128xbf16, #tpu.memory_space<vmem>>, %arg5: memref<3x128x256xbf16, #tpu.memory_space<vmem>>, %arg6: memref<1x256xf32, #tpu.memory_space<vmem>>, %arg7: memref<256x135xbf16, #tpu.memory_space<vmem>>, %arg8: memref<1x135xf32, #tpu.memory_space<vmem>>, %arg9: memref<4x135xf32, #tpu.memory_space<vmem>>, %arg10: memref<1x64x135xf32, #tpu.memory_space<vmem>>) attributes {dimension_semantics = [#tpu.dimension_semantics<parallel>, #tpu.dimension_semantics<parallel>], iteration_bounds = array<i64: 2, 4>, scalar_prefetch = 0 : i64, scratch_operands = 0 : i64, tpu.core_type = #tpu.core_type<tc>, window_params = [{transform_indices = @transform_0, window_bounds = array<i64: 1, 64, 128>}, {transform_indices = @transform_1, window_bounds = array<i64: 1, 16, 128>}, {transform_indices = @transform_2, window_bounds = array<i64: 1, 16, 128>}, {pipeline_mode = #tpu.pipeline_mode<synchronous>, transform_indices = @transform_3, window_bounds = array<i64: 3, 128, 256>}, {pipeline_mode = #tpu.pipeline_mode<synchronous>, transform_indices = @transform_4, window_bounds = array<i64: 1, 256>}, {pipeline_mode = #tpu.pipeline_mode<synchronous>, transform_indices = @transform_5, window_bounds = array<i64: 256, 135>}, {pipeline_mode = #tpu.pipeline_mode<synchronous>, transform_indices = @transform_6, window_bounds = array<i64: 1, 135>}, {pipeline_mode = #tpu.pipeline_mode<synchronous>, transform_indices = @transform_7, window_bounds = array<i64: 4, 135>}, {transform_indices = @transform_8, window_bounds = array<i64: 1, 64, 135>}]} {
    %c0 = arith.constant 0 : index
    %c0_0 = arith.constant 0 : index
    %c0_1 = arith.constant 0 : index
    %0 = vector.load %arg2[%c0, %c0_0, %c0_1] : memref<1x64x128xbf16, #tpu.memory_space<vmem>>, vector<1x64x128xbf16>
    %1 = vector.shape_cast %0 : vector<1x64x128xbf16> to vector<64x128xbf16>
    %c0_2 = arith.constant 0 : index
    %c0_3 = arith.constant 0 : index
    %c0_4 = arith.constant 0 : index
    %2 = vector.load %arg3[%c0_2, %c0_3, %c0_4] : memref<1x16x128xbf16, #tpu.memory_space<vmem>>, vector<1x16x128xbf16>
    %3 = vector.shape_cast %2 : vector<1x16x128xbf16> to vector<16x128xbf16>
    %c0_5 = arith.constant 0 : index
    %c0_6 = arith.constant 0 : index
    %c0_7 = arith.constant 0 : index
    %4 = vector.load %arg4[%c0_5, %c0_6, %c0_7] : memref<1x16x128xbf16, #tpu.memory_space<vmem>>, vector<1x16x128xbf16>
    %5 = vector.shape_cast %4 : vector<1x16x128xbf16> to vector<16x128xbf16>
    %c0_8 = arith.constant 0 : index
    %c0_9 = arith.constant 0 : index
    %c0_10 = arith.constant 0 : index
    %6 = vector.load %arg5[%c0_8, %c0_9, %c0_10] : memref<3x128x256xbf16, #tpu.memory_space<vmem>>, vector<1x128x256xbf16>
    %7 = vector.shape_cast %6 : vector<1x128x256xbf16> to vector<128x256xbf16>
    %cst = arith.constant dense<0.000000e+00> : vector<64x256xf32>
    %8 = tpu.matmul %1, %7, %cst {dimension_numbers = #tpu.dot_dimension_numbers<[1], [0], [0], [1], [0, 0, 1, 1], [], []>} : vector<64x128xbf16>, vector<128x256xbf16>, vector<64x256xf32> -> vector<64x256xf32>
    %9 = vector.extract_strided_slice %1 {offsets = [16, 0], sizes = [48, 128], strides = [1, 1]} : vector<64x128xbf16> to vector<48x128xbf16>
    %10 = tpu.concatenate %9, %3 in 0 : vector<48x128xbf16>, vector<16x128xbf16> -> vector<64x128xbf16>
    %c1 = arith.constant 1 : index
    %c0_11 = arith.constant 0 : index
    %c0_12 = arith.constant 0 : index
    %11 = vector.load %arg5[%c1, %c0_11, %c0_12] : memref<3x128x256xbf16, #tpu.memory_space<vmem>>, vector<1x128x256xbf16>
    %12 = vector.shape_cast %11 : vector<1x128x256xbf16> to vector<128x256xbf16>
    %cst_13 = arith.constant dense<0.000000e+00> : vector<64x256xf32>
    %13 = tpu.matmul %10, %12, %cst_13 {dimension_numbers = #tpu.dot_dimension_numbers<[1], [0], [0], [1], [0, 0, 1, 1], [], []>} : vector<64x128xbf16>, vector<128x256xbf16>, vector<64x256xf32> -> vector<64x256xf32>
    %14 = arith.addf %8, %13 : vector<64x256xf32>
    %15 = vector.extract_strided_slice %1 {offsets = [32, 0], sizes = [32, 128], strides = [1, 1]} : vector<64x128xbf16> to vector<32x128xbf16>
    %16 = tpu.concatenate %15, %3, %5 in 0 : vector<32x128xbf16>, vector<16x128xbf16>, vector<16x128xbf16> -> vector<64x128xbf16>
    %c2 = arith.constant 2 : index
    %c0_14 = arith.constant 0 : index
    %c0_15 = arith.constant 0 : index
    %17 = vector.load %arg5[%c2, %c0_14, %c0_15] : memref<3x128x256xbf16, #tpu.memory_space<vmem>>, vector<1x128x256xbf16>
    %18 = vector.shape_cast %17 : vector<1x128x256xbf16> to vector<128x256xbf16>
    %cst_16 = arith.constant dense<0.000000e+00> : vector<64x256xf32>
    %19 = tpu.matmul %16, %18, %cst_16 {dimension_numbers = #tpu.dot_dimension_numbers<[1], [0], [0], [1], [0, 0, 1, 1], [], []>} : vector<64x128xbf16>, vector<128x256xbf16>, vector<64x256xf32> -> vector<64x256xf32>
    %20 = arith.addf %14, %19 : vector<64x256xf32>
    %c0_17 = arith.constant 0 : index
    %c0_18 = arith.constant 0 : index
    %21 = vector.load %arg6[%c0_17, %c0_18] : memref<1x256xf32, #tpu.memory_space<vmem>>, vector<1x256xf32>
    %22 = vector.broadcast %21 : vector<1x256xf32> to vector<64x256xf32>
    %23 = arith.addf %20, %22 : vector<64x256xf32>
    %cst_19 = arith.constant 0.000000e+00 : f32
    %24 = vector.broadcast %cst_19 : f32 to vector<64x256xf32>
    %25 = arith.maximumf %23, %24 : vector<64x256xf32>
    %26 = arith.truncf %25 : vector<64x256xf32> to vector<64x256xbf16>
    %c0_20 = arith.constant 0 : index
    %c0_21 = arith.constant 0 : index
    %27 = vector.load %arg7[%c0_20, %c0_21] : memref<256x135xbf16, #tpu.memory_space<vmem>>, vector<256x135xbf16>
    %cst_22 = arith.constant dense<0.000000e+00> : vector<64x135xf32>
    %28 = tpu.matmul %26, %27, %cst_22 {dimension_numbers = #tpu.dot_dimension_numbers<[1], [0], [0], [1], [0, 0, 1, 1], [], []>} : vector<64x256xbf16>, vector<256x135xbf16>, vector<64x135xf32> -> vector<64x135xf32>
    %c0_23 = arith.constant 0 : index
    %c0_24 = arith.constant 0 : index
    %29 = vector.load %arg8[%c0_23, %c0_24] : memref<1x135xf32, #tpu.memory_space<vmem>>, vector<1x135xf32>
    %30 = vector.broadcast %29 : vector<1x135xf32> to vector<64x135xf32>
    %31 = arith.addf %28, %30 : vector<64x135xf32>
    %c0_25 = arith.constant 0 : index
    %c0_26 = arith.constant 0 : index
    %32 = vector.load %arg9[%c0_25, %c0_26] : memref<4x135xf32, #tpu.memory_space<vmem>>, vector<1x135xf32>
    %c1_27 = arith.constant 1 : index
    %c0_28 = arith.constant 0 : index
    %33 = vector.load %arg9[%c1_27, %c0_28] : memref<4x135xf32, #tpu.memory_space<vmem>>, vector<1x135xf32>
    %c2_29 = arith.constant 2 : index
    %c0_30 = arith.constant 0 : index
    %34 = vector.load %arg9[%c2_29, %c0_30] : memref<4x135xf32, #tpu.memory_space<vmem>>, vector<1x135xf32>
    %c3 = arith.constant 3 : index
    %c0_31 = arith.constant 0 : index
    %35 = vector.load %arg9[%c3, %c0_31] : memref<4x135xf32, #tpu.memory_space<vmem>>, vector<1x135xf32>
    %cst_32 = arith.constant 5.000000e-01 : f32
    %36 = vector.broadcast %cst_32 : f32 to vector<1x135xf32>
    %37 = arith.cmpf ogt, %35, %36 : vector<1x135xf32>
    %38 = math.exp %31 : vector<64x135xf32>
    %39 = vector.shape_cast %37 : vector<1x135xi1> to vector<1x135xi1>
    %40 = vector.broadcast %39 : vector<1x135xi1> to vector<64x135xi1>
    %41 = arith.select %40, %38, %31 : vector<64x135xi1>, vector<64x135xf32>
    %42 = tpu.iota {dimensions = array<i32: 0>} : vector<64x1xi32>
    %43 = arith.sitofp %42 : vector<64x1xi32> to vector<64x1xf32>
    %cst_33 = arith.constant 6.250000e-02 : f32
    %44 = vector.broadcast %cst_33 : f32 to vector<64x1xf32>
    %45 = arith.mulf %43, %44 : vector<64x1xf32>
    %cst_34 = arith.constant 9.99999974E-5 : f32
    %46 = vector.broadcast %cst_34 : f32 to vector<64x1xf32>
    %47 = arith.addf %45, %46 : vector<64x1xf32>
    %48 = math.floor %47 : vector<64x1xf32>
    %cst_35 = arith.constant 1.600000e+01 : f32
    %49 = vector.broadcast %cst_35 : f32 to vector<64x1xf32>
    %50 = arith.mulf %48, %49 : vector<64x1xf32>
    %51 = arith.subf %43, %50 : vector<64x1xf32>
    %c4_i32 = arith.constant 4 : i32
    %52 = arith.muli %arg1, %c4_i32 : i32
    %53 = arith.sitofp %52 : i32 to f32
    %cst_36 = arith.constant 3.200000e+01 : f32
    %54 = vector.broadcast %cst_36 : f32 to vector<64x1xf32>
    %55 = arith.mulf %51, %54 : vector<64x1xf32>
    %56 = vector.broadcast %53 : f32 to vector<64x1xf32>
    %57 = arith.addf %48, %56 : vector<64x1xf32>
    %cst_37 = arith.constant 3.200000e+01 : f32
    %58 = vector.broadcast %cst_37 : f32 to vector<64x1xf32>
    %59 = arith.mulf %57, %58 : vector<64x1xf32>
    %60 = vector.broadcast %32 : vector<1x135xf32> to vector<64x135xf32>
    %61 = arith.mulf %41, %60 : vector<64x135xf32>
    %62 = vector.broadcast %55 : vector<64x1xf32> to vector<64x135xf32>
    %63 = vector.broadcast %33 : vector<1x135xf32> to vector<64x135xf32>
    %64 = arith.mulf %62, %63 : vector<64x135xf32>
    %65 = arith.addf %61, %64 : vector<64x135xf32>
    %66 = vector.broadcast %59 : vector<64x1xf32> to vector<64x135xf32>
    %67 = vector.broadcast %34 : vector<1x135xf32> to vector<64x135xf32>
    %68 = arith.mulf %66, %67 : vector<64x135xf32>
    %69 = arith.addf %65, %68 : vector<64x135xf32>
    %c0_38 = arith.constant 0 : index
    %c0_39 = arith.constant 0 : index
    %c0_40 = arith.constant 0 : index
    %70 = vector.load %arg10[%c0_38, %c0_39, %c0_40] : memref<1x64x135xf32, #tpu.memory_space<vmem>>, vector<1x64x135xf32>
    %71 = vector.shape_cast %70 : vector<1x64x135xf32> to vector<64x135xf32>
    %72 = vector.shape_cast %69 : vector<64x135xf32> to vector<1x64x135xf32>
    tpu.vector_store %arg10[%c0_38, %c0_39, %c0_40], %72 {strides = array<i32>} : memref<1x64x135xf32, #tpu.memory_space<vmem>>, vector<1x64x135xf32>,
    return
  }
  func.func @transform_0(%arg0: i32, %arg1: i32) -> (i32, i32, i32) {
    %c0_i32 = arith.constant 0 : i32
    %c0_i32_0 = arith.constant 0 : i32
    return %arg0, %arg1, %c0_i32 : i32, i32, i32
  }
  func.func @transform_1(%arg0: i32, %arg1: i32) -> (i32, i32, i32) {
    %c1_i32 = arith.constant 1 : i32
    %0 = arith.addi %arg1, %c1_i32 : i32
    %c4_i32 = arith.constant 4 : i32
    %1 = arith.muli %0, %c4_i32 : i32
    %c0_i32 = arith.constant 0 : i32
    %c0_i32_0 = arith.constant 0 : i32
    return %arg0, %1, %c0_i32 : i32, i32, i32
  }
  func.func @transform_2(%arg0: i32, %arg1: i32) -> (i32, i32, i32) {
    %c1_i32 = arith.constant 1 : i32
    %0 = arith.addi %arg1, %c1_i32 : i32
    %c4_i32 = arith.constant 4 : i32
    %1 = arith.muli %0, %c4_i32 : i32
    %c1_i32_0 = arith.constant 1 : i32
    %2 = arith.addi %1, %c1_i32_0 : i32
    %c0_i32 = arith.constant 0 : i32
    %c0_i32_1 = arith.constant 0 : i32
    return %arg0, %2, %c0_i32 : i32, i32, i32
  }
  func.func @transform_3(%arg0: i32, %arg1: i32) -> (i32, i32, i32) {
    %c0_i32 = arith.constant 0 : i32
    %c0_i32_0 = arith.constant 0 : i32
    %c0_i32_1 = arith.constant 0 : i32
    %c0_i32_2 = arith.constant 0 : i32
    return %c0_i32, %c0_i32_0, %c0_i32_1 : i32, i32, i32
  }
  func.func @transform_4(%arg0: i32, %arg1: i32) -> (i32, i32) {
    %c0_i32 = arith.constant 0 : i32
    %c0_i32_0 = arith.constant 0 : i32
    %c0_i32_1 = arith.constant 0 : i32
    return %c0_i32, %c0_i32_0 : i32, i32
  }
  func.func @transform_5(%arg0: i32, %arg1: i32) -> (i32, i32) {
    %c0_i32 = arith.constant 0 : i32
    %c0_i32_0 = arith.constant 0 : i32
    %c0_i32_1 = arith.constant 0 : i32
    return %c0_i32, %c0_i32_0 : i32, i32
  }
  func.func @transform_6(%arg0: i32, %arg1: i32) -> (i32, i32) {
    %c0_i32 = arith.constant 0 : i32
    %c0_i32_0 = arith.constant 0 : i32
    %c0_i32_1 = arith.constant 0 : i32
    return %c0_i32, %c0_i32_0 : i32, i32
  }
  func.func @transform_7(%arg0: i32, %arg1: i32) -> (i32, i32) {
    %c0_i32 = arith.constant 0 : i32
    %c0_i32_0 = arith.constant 0 : i32
    %c0_i32_1 = arith.constant 0 : i32
    return %c0_i32, %c0_i32_0 : i32, i32
  }
  func.func @transform_8(%arg0: i32, %arg1: i32) -> (i32, i32, i32) {
    %c0_i32 = arith.constant 0 : i32
    %c0_i32_0 = arith.constant 0 : i32
    return %arg0, %arg1, %c0_i32 : i32, i32, i32
  }
}

</mosaic_0001>

<llo_original>
// kernel: tpu_custom_call.1
$region0: #{tpu_custom_call.1}
  #allocation0 [shape = 'u32[]', space=smem, size = 0x4, offset = 0x4, fixed_abs, tag = 'smem constant byte address 0x4 - core index']
  #allocation1 [shape = 'u32[72,128]{1,0:T(1,128)}', space=vmem, size = 0x9000, scoped, tag = 'internal scratch']
  %s0 = inlined_call_operand.hbm [shape: bf16[2,288,128], index: 0, kind: input, shape index: {}]
  %s1 = inlined_call_operand.hbm [shape: bf16[2,288,128], index: 1, kind: input, shape index: {}]
  %s2 = inlined_call_operand.hbm [shape: bf16[2,288,128], index: 2, kind: input, shape index: {}]
  %s3 = inlined_call_operand.vmem [shape: bf16[3,128,256], index: 3, kind: input, shape index: {}]
  %s4 = inlined_call_operand.vmem [shape: f32[1,256], index: 4, kind: input, shape index: {}]
  %s5 = inlined_call_operand.vmem [shape: bf16[256,135], index: 5, kind: input, shape index: {}]
  %s6 = inlined_call_operand.vmem [shape: f32[1,135], index: 6, kind: input, shape index: {}]
  %s7 = inlined_call_operand.vmem [shape: f32[4,135], index: 7, kind: input, shape index: {}]
  %s8 = inlined_call_operand.vmem [shape: f32[2,256,135], index: 8, kind: output, shape index: {}]
  %s9 = sld [smem:[#allocation0]]
  $region77: #{tpu_custom_call.1} parent=0
    _
  %s11 = ssub.s32 1, %s9
  %s12 = scalar_select 0, %s11, %s9
  $region1: #{tpu_custom_call.1} parent=0
    #allocation2 [shape = 'u8[32768]{0}', space=vmem, size = 0x8000, scoped, tag = 'input window, operand 0']
    #allocation3 [shape = 's32[2]{0}', space=sflag, size = 0x8, scoped, tag = 'scoped memory for tpu_custom_call.1']
    #allocation4 [shape = 'u8[8192]{0}', space=vmem, size = 0x2000, scoped, tag = 'input window, operand 1']
    #allocation5 [shape = 's32[2]{0}', space=sflag, size = 0x8, scoped, tag = 'scoped memory for tpu_custom_call.1']
    #allocation6 [shape = 'u8[8192]{0}', space=vmem, size = 0x2000, scoped, tag = 'input window, operand 2']
    %13 = vsyncpa [#allocation3], 0
    %s14 = scalar_lea.sflag [#allocation3], 1
    %15 = vsyncpa %s14, 0
    %16 = vsyncpa [#allocation5], 0
    %s17 = scalar_lea.sflag [#allocation5], 1
    %18 = vsyncpa %s17, 0
    loop: start=0, step=1, limit=10
    $region2: #{tpu_custom_call.1} parent=1 // loop_pre_header
      _
    $region3: #{tpu_custom_call.1} parent=1 // loop_header
      %s20 = sphi 0, %s24
      %p21 = scmp.ge.s32.totalorder %s20, 10
      %s27 = sphi 0, %s39
      %s28 = sphi 0, %s35
      %s29 = sphi 0, %s27
      %s30 = sphi 0, %s28
      %s31 = sphi 0, %s29
      %s32 = sphi 0, %s30
      %s44 = sphi 0, %s46
      %s47 = sphi 0, %s44
      %s48 = sphi 0, %s47
      %s64 = sphi 0, %s48
      %s76 = sphi 0, %s78
      %s79 = sphi 0, %s76
      %s80 = sphi 0, %s79
      %s96 = sphi 0, %s80
      %s110 = sphi 0, %s112
      %s113 = sphi 0, %s110
      %s114 = sphi 0, %s113
      %s130 = sphi 0, %s114
      %s134 = sphi 0, %s134
      %s136 = sphi 0, %s134
      %s137 = sphi 0, %s136
      %s151 = sphi 0, %s137
      %s155 = sphi 0, %s155
      %s157 = sphi 0, %s155
      %s158 = sphi 0, %s157
      %s172 = sphi 0, %s158
      %s176 = sphi 0, %s176
      %s178 = sphi 0, %s176
      %s179 = sphi 0, %s178
      %s193 = sphi 0, %s179
      %s197 = sphi 0, %s197
      %s199 = sphi 0, %s197
      %s200 = sphi 0, %s199
      %s214 = sphi 0, %s200
      %s218 = sphi 0, %s218
      %s220 = sphi 0, %s218
      %s221 = sphi 0, %s220
      %s235 = sphi 0, %s221
      %s243 = sphi 0, %s245
      %s246 = sphi 0, %s243
      %s247 = sphi 0, %s246
      %s263 = sphi 0, %s247
    $region4: #{tpu_custom_call.1} parent=1 // loop_header_branch
      %23 = sbr.rel (%p21) target = $region8
    $region5: #{tpu_custom_call.1} parent=1 // loop_body
      %s25 = ssub.s32 %s20, 1
      %s26 = ssub.s32 %s20, 2
      %s33 = sadd.s32 1, %s28
      %p34 = scmp.ge.s32.totalorder %s33, 4
      %s35 = scalar_select %p34, 0, %s33
      %s36 = sadd.s32 1, %s27
      %s37 = scalar_select %p34, %s36, %s27
      %p38 = scmp.ge.s32.totalorder %s37, 2
      %s39 = scalar_select %p38, 0, %s37
      %s40 = ssub.s32 %s27, %s39
      %s41 = ssub.s32 %s28, %s35
      %s42 = sor.u32 %s40, %s41
      %p43 = scmp.eq.s32.totalorder %s42, 0
      %s45 = sadd.s32 %s44, 1
      %s46 = scalar_select %p43, %s44, %s45
      %p49 = pneg %p43
      %p50 = scmp.eq.s32.totalorder %s20, 7
      %p51 = por %p49, %p50
      %p52 = scmp.ne.s32.totalorder %s44, %s47
      %p53 = scmp.eq.s32.totalorder %s20, 0
      %p54 = por %p52, %p53
      %p55 = scmp.ne.s32.totalorder %s44, %s47
      %p56 = scmp.eq.s32.totalorder %s25, 7
      %p57 = por %p55, %p56
      %p58 = scmp.ne.s32.totalorder %s47, %s48
      %p59 = scmp.eq.s32.totalorder %s25, 0
      %p60 = por %p58, %p59
      %p61 = scmp.ne.s32.totalorder %s47, %s48
      %p62 = scmp.eq.s32.totalorder %s26, 7
      %p63 = por %p61, %p62
      %p65 = scmp.ne.s32.totalorder %s48, %s64
      %p66 = scmp.eq.s32.totalorder %s26, 0
      %p67 = por %p65, %p66
      %s68 = sadd.s32 %s28, 1
      %s69 = smul.u32 %s68, 4
      %s70 = sadd.s32 %s35, 1
      %s71 = smul.u32 %s70, 4
      %s72 = ssub.s32 %s27, %s39
      %s73 = ssub.s32 %s69, %s71
      %s74 = sor.u32 %s72, %s73
      %p75 = scmp.eq.s32.totalorder %s74, 0
      %s77 = sadd.s32 %s76, 1
      %s78 = scalar_select %p75, %s76, %s77
      %p81 = pneg %p75
      %p82 = scmp.eq.s32.totalorder %s20, 7
      %p83 = por %p81, %p82
      %p84 = scmp.ne.s32.totalorder %s76, %s79
      %p85 = scmp.eq.s32.totalorder %s20, 0
      %p86 = por %p84, %p85
      %p87 = scmp.ne.s32.totalorder %s76, %s79
      %p88 = scmp.eq.s32.totalorder %s25, 7
      %p89 = por %p87, %p88
      %p90 = scmp.ne.s32.totalorder %s79, %s80
      %p91 = scmp.eq.s32.totalorder %s25, 0
      %p92 = por %p90, %p91
      %p93 = scmp.ne.s32.totalorder %s79, %s80
      %p94 = scmp.eq.s32.totalorder %s26, 7
      %p95 = por %p93, %p94
      %p97 = scmp.ne.s32.totalorder %s80, %s96
      %p98 = scmp.eq.s32.totalorder %s26, 0
      %p99 = por %p97, %p98
      %s100 = sadd.s32 %s28, 1
      %s101 = smul.u32 %s100, 4
      %s102 = sadd.s32 %s101, 1
      %s103 = sadd.s32 %s35, 1
      %s104 = smul.u32 %s103, 4
      %s105 = sadd.s32 %s104, 1
      %s106 = ssub.s32 %s27, %s39
      %s107 = ssub.s32 %s102, %s105
      %s108 = sor.u32 %s106, %s107
      %p109 = scmp.eq.s32.totalorder %s108, 0
      %s111 = sadd.s32 %s110, 1
      %s112 = scalar_select %p109, %s110, %s111
      %p115 = pneg %p109
      %p116 = scmp.eq.s32.totalorder %s20, 7
      %p117 = por %p115, %p116
      %p118 = scmp.ne.s32.totalorder %s110, %s113
      %p119 = scmp.eq.s32.totalorder %s20, 0
      %p120 = por %p118, %p119
      %p121 = scmp.ne.s32.totalorder %s110, %s113
      %p122 = scmp.eq.s32.totalorder %s25, 7
      %p123 = por %p121, %p122
      %p124 = scmp.ne.s32.totalorder %s113, %s114
      %p125 = scmp.eq.s32.totalorder %s25, 0
      %p126 = por %p124, %p125
      %p127 = scmp.ne.s32.totalorder %s113, %s114
      %p128 = scmp.eq.s32.totalorder %s26, 7
      %p129 = por %p127, %p128
      %p131 = scmp.ne.s32.totalorder %s114, %s130
      %p132 = scmp.eq.s32.totalorder %s26, 0
      %p133 = por %p131, %p132
      %s135 = sadd.s32 %s134, 1
      %p138 = scmp.eq.s32.totalorder %s20, 7
      %p139 = scmp.ne.s32.totalorder %s134, %s136
      %p140 = scmp.eq.s32.totalorder %s20, 0
      %p141 = por %p139, %p140
      %p142 = scmp.ne.s32.totalorder %s134, %s136
      %p143 = scmp.eq.s32.totalorder %s25, 7
      %p144 = por %p142, %p143
      %p145 = scmp.ne.s32.totalorder %s136, %s137
      %p146 = scmp.eq.s32.totalorder %s25, 0
      %p147 = por %p145, %p146
      %p148 = scmp.ne.s32.totalorder %s136, %s137
      %p149 = scmp.eq.s32.totalorder %s26, 7
      %p150 = por %p148, %p149
      %p152 = scmp.ne.s32.totalorder %s137, %s151
      %p153 = scmp.eq.s32.totalorder %s26, 0
      %p154 = por %p152, %p153
      %s156 = sadd.s32 %s155, 1
      %p159 = scmp.eq.s32.totalorder %s20, 7
      %p160 = scmp.ne.s32.totalorder %s155, %s157
      %p161 = scmp.eq.s32.totalorder %s20, 0
      %p162 = por %p160, %p161
      %p163 = scmp.ne.s32.totalorder %s155, %s157
      %p164 = scmp.eq.s32.totalorder %s25, 7
      %p165 = por %p163, %p164
      %p166 = scmp.ne.s32.totalorder %s157, %s158
      %p167 = scmp.eq.s32.totalorder %s25, 0
      %p168 = por %p166, %p167
      %p169 = scmp.ne.s32.totalorder %s157, %s158
      %p170 = scmp.eq.s32.totalorder %s26, 7
      %p171 = por %p169, %p170
      %p173 = scmp.ne.s32.totalorder %s158, %s172
      %p174 = scmp.eq.s32.totalorder %s26, 0
      %p175 = por %p173, %p174
      %s177 = sadd.s32 %s176, 1
      %p180 = scmp.eq.s32.totalorder %s20, 7
      %p181 = scmp.ne.s32.totalorder %s176, %s178
      %p182 = scmp.eq.s32.totalorder %s20, 0
      %p183 = por %p181, %p182
      %p184 = scmp.ne.s32.totalorder %s176, %s178
      %p185 = scmp.eq.s32.totalorder %s25, 7
      %p186 = por %p184, %p185
      %p187 = scmp.ne.s32.totalorder %s178, %s179
      %p188 = scmp.eq.s32.totalorder %s25, 0
      %p189 = por %p187, %p188
      %p190 = scmp.ne.s32.totalorder %s178, %s179
      %p191 = scmp.eq.s32.totalorder %s26, 7
      %p192 = por %p190, %p191
      %p194 = scmp.ne.s32.totalorder %s179, %s193
      %p195 = scmp.eq.s32.totalorder %s26, 0
      %p196 = por %p194, %p195
      %s198 = sadd.s32 %s197, 1
      %p201 = scmp.eq.s32.totalorder %s20, 7
      %p202 = scmp.ne.s32.totalorder %s197, %s199
      %p203 = scmp.eq.s32.totalorder %s20, 0
      %p204 = por %p202, %p203
      %p205 = scmp.ne.s32.totalorder %s197, %s199
      %p206 = scmp.eq.s32.totalorder %s25, 7
      %p207 = por %p205, %p206
      %p208 = scmp.ne.s32.totalorder %s199, %s200
      %p209 = scmp.eq.s32.totalorder %s25, 0
      %p210 = por %p208, %p209
      %p211 = scmp.ne.s32.totalorder %s199, %s200
      %p212 = scmp.eq.s32.totalorder %s26, 7
      %p213 = por %p211, %p212
      %p215 = scmp.ne.s32.totalorder %s200, %s214
      %p216 = scmp.eq.s32.totalorder %s26, 0
      %p217 = por %p215, %p216
      %s219 = sadd.s32 %s218, 1
      %p222 = scmp.eq.s32.totalorder %s20, 7
      %p223 = scmp.ne.s32.totalorder %s218, %s220
      %p224 = scmp.eq.s32.totalorder %s20, 0
      %p225 = por %p223, %p224
      %p226 = scmp.ne.s32.totalorder %s218, %s220
      %p227 = scmp.eq.s32.totalorder %s25, 7
      %p228 = por %p226, %p227
      %p229 = scmp.ne.s32.totalorder %s220, %s221
      %p230 = scmp.eq.s32.totalorder %s25, 0
      %p231 = por %p229, %p230
      %p232 = scmp.ne.s32.totalorder %s220, %s221
      %p233 = scmp.eq.s32.totalorder %s26, 7
      %p234 = por %p232, %p233
      %p236 = scmp.ne.s32.totalorder %s221, %s235
      %p237 = scmp.eq.s32.totalorder %s26, 0
      %p238 = por %p236, %p237
      %s239 = ssub.s32 %s27, %s39
      %s240 = ssub.s32 %s28, %s35
      %s241 = sor.u32 %s239, %s240
      %p242 = scmp.eq.s32.totalorder %s241, 0
      %s244 = sadd.s32 %s243, 1
      %s245 = scalar_select %p242, %s243, %s244
      %p248 = pneg %p242
      %p249 = scmp.eq.s32.totalorder %s20, 7
      %p250 = por %p248, %p249
      %p251 = scmp.ne.s32.totalorder %s243, %s246
      %p252 = scmp.eq.s32.totalorder %s20, 0
      %p253 = por %p251, %p252
      %p254 = scmp.ne.s32.totalorder %s243, %s246
      %p255 = scmp.eq.s32.totalorder %s25, 7
      %p256 = por %p254, %p255
      %p257 = scmp.ne.s32.totalorder %s246, %s247
      %p258 = scmp.eq.s32.totalorder %s25, 0
      %p259 = por %p257, %p258
      %p260 = scmp.ne.s32.totalorder %s246, %s247
      %p261 = scmp.eq.s32.totalorder %s26, 7
      %p262 = por %p260, %p261
      %p264 = scmp.ne.s32.totalorder %s247, %s263
      %p265 = scmp.eq.s32.totalorder %s26, 0
      %p266 = por %p264, %p265
      %p267 = scmp.le.s32.totalorder 1, %s20
      %p268 = scmp.lt.s32.totalorder %s20, 9
      %p269 = pnand %p267, %p268
      %p270 = pneg %p269
      // Predicated region
      $region9: #{tpu_custom_call.1} parent=5 // pred_check
        _
      $region10: #{tpu_custom_call.1} parent=5 // pred_check_branch
        %272 = sbr.rel (%p269) target = $region12
      $region11: #{tpu_custom_call.1} parent=5 // pred_region
        %s273 = ssub.s32 %s20, 1
        // Predicated region
        $region13: #{tpu_custom_call.1} parent=11 // pred_check
          %p274 = pneg %p147
        $region14: #{tpu_custom_call.1} parent=11 // pred_check_branch
          %276 = sbr.rel (%p274) target = $region16
        $region15: #{tpu_custom_call.1} parent=11 // pred_region
          _
        $region16: #{tpu_custom_call.1} parent=11 // pred_fallthru
          _
        // Predicated region
        $region17: #{tpu_custom_call.1} parent=11 // pred_check
          %p277 = pneg %p168
        $region18: #{tpu_custom_call.1} parent=11 // pred_check_branch
          %279 = sbr.rel (%p277) target = $region20
        $region19: #{tpu_custom_call.1} parent=11 // pred_region
          _
        $region20: #{tpu_custom_call.1} parent=11 // pred_fallthru
          _
        // Predicated region
        $region21: #{tpu_custom_call.1} parent=11 // pred_check
          %p280 = pneg %p189
        $region22: #{tpu_custom_call.1} parent=11 // pred_check_branch
          %282 = sbr.rel (%p280) target = $region24
        $region23: #{tpu_custom_call.1} parent=11 // pred_region
          _
        $region24: #{tpu_custom_call.1} parent=11 // pred_fallthru
          _
        // Predicated region
        $region25: #{tpu_custom_call.1} parent=11 // pred_check
          %p283 = pneg %p210
        $region26: #{tpu_custom_call.1} parent=11 // pred_check_branch
          %285 = sbr.rel (%p283) target = $region28
        $region27: #{tpu_custom_call.1} parent=11 // pred_region
          _
        $region28: #{tpu_custom_call.1} parent=11 // pred_fallthru
          _
        // Predicated region
        $region29: #{tpu_custom_call.1} parent=11 // pred_check
          %p286 = pneg %p231
        $region30: #{tpu_custom_call.1} parent=11 // pred_check_branch
          %288 = sbr.rel (%p286) target = $region32
        $region31: #{tpu_custom_call.1} parent=11 // pred_region
          _
        $region32: #{tpu_custom_call.1} parent=11 // pred_fallthru
          _
      $region12: #{tpu_custom_call.1} parent=5 // pred_fallthru
        _
      %p289 = scmp.lt.s32.totalorder %s20, 8
      // Predicated region
      $region33: #{tpu_custom_call.1} parent=5 // pred_check
        %p290 = pneg %p289
      $region34: #{tpu_custom_call.1} parent=5 // pred_check_branch
        %292 = sbr.rel (%p290) target = $region36
      $region35: #{tpu_custom_call.1} parent=5 // pred_region
        // Predicated region
        $region37: #{tpu_custom_call.1} parent=35 // pred_check
          %p293 = pneg %p54
        $region38: #{tpu_custom_call.1} parent=35 // pred_check_branch
          %295 = sbr.rel (%p293) target = $region40
        $region39: #{tpu_custom_call.1} parent=35 // pred_region
          %s296 = sand.u32 %s44, 1
          %s297 = scalar_lea.sflag [#allocation3], %s296
          %s298 = sand.u32 %s44, 1
          %s299 = smul.addr %s298, 32
          %s300 = scalar_lea.vmem [#allocation2], %s299
          %s301 = smul.u32 8, %s28
          %s302 = ssub.s32 36, %s301
          %p303 = scmp.lt.s32.totalorder %s302, 8
          %s304 = scalar_select %p303, %s302, 8
          %s305 = smul.u32 4, %s304
          %s306 = ssub.s32 32, %s305
          %s307 = sshll.u32 %s306, 4
          %308 = vsyncadd %s297, %s307
          %p309 = scmp.ne.s32.totalorder 0, %s305
          %s310 = smul.addr %s27, 36
          %s311 = sadd.s32 %s301, %s310
          %s312 = smul.addr %s311, 4
          %s313 = scalar_lea.hbm %s0, %s312
          %s314 = smul.u32 4, %s304
          %s315 = sshll.u32 %s313, 4
          %s316 = int_to_ptr.hbm [resolvable:$true] %s315
          %s317 = sshll.u32 %s300, 4
          %s318 = int_to_ptr.vmem [resolvable:$true] %s317
          %s319 = sshll.u32 %s314, 4
          %323 = dma.hbm_to_vmem [thread:$0]  (%p309), %s316, %s319, %s318, %s297, 64, 64, 4
        $region40: #{tpu_custom_call.1} parent=35 // pred_fallthru
          _
        // Predicated region
        $region41: #{tpu_custom_call.1} parent=35 // pred_check
          %p324 = pneg %p86
        $region42: #{tpu_custom_call.1} parent=35 // pred_check_branch
          %326 = sbr.rel (%p324) target = $region44
        $region43: #{tpu_custom_call.1} parent=35 // pred_region
          %s327 = sand.u32 %s20, 1
          %s328 = scalar_lea.sflag [#allocation5], %s327
          %s329 = sand.u32 %s76, 1
          %s330 = smul.addr %s329, 8
          %s331 = scalar_lea.vmem [#allocation4], %s330
          %s332 = sadd.s32 %s28, 1
          %s333 = smul.u32 %s332, 4
          %s334 = smul.u32 2, %s333
          %336 = vsyncadd %s328, 0
          %s337 = smul.addr %s27, 36
          %s338 = sadd.s32 %s334, %s337
          %s339 = smul.addr %s338, 4
          %s340 = scalar_lea.hbm %s1, %s339
          %s341 = sshll.u32 %s340, 4
          %s342 = int_to_ptr.hbm [resolvable:$true] %s341
          %s343 = sshll.u32 %s331, 4
          %s344 = int_to_ptr.vmem [resolvable:$true] %s343
          %349 = dma.hbm_to_vmem [thread:$0]  %s342, 128, %s344, %s328, 64, 64, 4
        $region44: #{tpu_custom_call.1} parent=35 // pred_fallthru
          _
        // Predicated region
        $region45: #{tpu_custom_call.1} parent=35 // pred_check
          %p350 = pneg %p120
        $region46: #{tpu_custom_call.1} parent=35 // pred_check_branch
          %352 = sbr.rel (%p350) target = $region48
        $region47: #{tpu_custom_call.1} parent=35 // pred_region
          %s353 = sand.u32 %s20, 1
          %s354 = scalar_lea.sflag [#allocation5], %s353
          %s355 = sand.u32 %s110, 1
          %s356 = smul.addr %s355, 8
          %s357 = scalar_lea.vmem [#allocation6], %s356
          %s358 = sadd.s32 %s28, 1
          %s359 = smul.u32 %s358, 4
          %s360 = sadd.s32 %s359, 1
          %s361 = smul.u32 2, %s360
          %363 = vsyncadd %s354, 0
          %s364 = smul.addr %s27, 36
          %s365 = sadd.s32 %s361, %s364
          %s366 = smul.addr %s365, 4
          %s367 = scalar_lea.hbm %s2, %s366
          %s368 = sshll.u32 %s367, 4
          %s369 = int_to_ptr.hbm [resolvable:$true] %s368
          %s370 = sshll.u32 %s357, 4
          %s371 = int_to_ptr.vmem [resolvable:$true] %s370
          %376 = dma.hbm_to_vmem [thread:$0]  %s369, 128, %s371, %s354, 64, 64, 4
        $region48: #{tpu_custom_call.1} parent=35 // pred_fallthru
          _
      $region36: #{tpu_custom_call.1} parent=5 // pred_fallthru
        _
      %p377 = scmp.le.s32.totalorder 1, %s20
      %p378 = scmp.lt.s32.totalorder %s20, 9
      %p379 = pnand %p377, %p378
      %p380 = pneg %p379
      // Predicated region
      $region49: #{tpu_custom_call.1} parent=5 // pred_check
        _
      $region50: #{tpu_custom_call.1} parent=5 // pred_check_branch
        %382 = sbr.rel (%p379) target = $region52
      $region51: #{tpu_custom_call.1} parent=5 // pred_region
        %s383 = ssub.s32 %s20, 1
        %s384 = sand.u32 %s47, 1
        %s385 = scalar_lea.sflag [#allocation3], %s384
        %s386 = sand.u32 %s47, 1
        %s387 = smul.addr %s386, 32
        %s388 = scalar_lea.vmem [#allocation2], %s387
        // Predicated region
        $region53: #{tpu_custom_call.1} parent=51 // pred_check
          %p389 = pneg %p60
        $region54: #{tpu_custom_call.1} parent=51 // pred_check_branch
          %391 = sbr.rel (%p389) target = $region56
        $region55: #{tpu_custom_call.1} parent=51 // pred_region
          %393 = dma.done %s385, 512
        $region56: #{tpu_custom_call.1} parent=51 // pred_fallthru
          _
        %s394 = sand.u32 %s25, 1
        %s395 = scalar_lea.sflag [#allocation5], %s394
        %s396 = sand.u32 %s79, 1
        %s397 = smul.addr %s396, 8
        %s398 = scalar_lea.vmem [#allocation4], %s397
        // Predicated region
        $region57: #{tpu_custom_call.1} parent=51 // pred_check
          %p399 = pneg %p92
        $region58: #{tpu_custom_call.1} parent=51 // pred_check_branch
          %401 = sbr.rel (%p399) target = $region60
        $region59: #{tpu_custom_call.1} parent=51 // pred_region
          %403 = dma.done %s395, 128
        $region60: #{tpu_custom_call.1} parent=51 // pred_fallthru
          _
        %s404 = sand.u32 %s25, 1
        %s405 = scalar_lea.sflag [#allocation5], %s404
        %s406 = sand.u32 %s113, 1
        %s407 = smul.addr %s406, 8
        %s408 = scalar_lea.vmem [#allocation6], %s407
        // Predicated region
        $region61: #{tpu_custom_call.1} parent=51 // pred_check
          %p409 = pneg %p126
        $region62: #{tpu_custom_call.1} parent=51 // pred_check_branch
          %411 = sbr.rel (%p409) target = $region64
        $region63: #{tpu_custom_call.1} parent=51 // pred_region
          %413 = dma.done %s405, 128
        $region64: #{tpu_custom_call.1} parent=51 // pred_fallthru
          _
        %s414 = sand.u32 %s47, 1
        %s415 = scalar_lea.sflag [#allocation3], %s414
        %s416 = sand.u32 %s47, 1
        %s417 = smul.addr %s416, 32
        %s418 = scalar_lea.vmem [#allocation2], %s417
        %p419 = pneg %p60
        %p420 = pneg %p57
        %s421 = sand.u32 %s25, 1
        %s422 = scalar_lea.sflag [#allocation5], %s421
        %s423 = sand.u32 %s79, 1
        %s424 = smul.addr %s423, 8
        %s425 = scalar_lea.vmem [#allocation4], %s424
        %p426 = pneg %p92
        %p427 = pneg %p89
        %s428 = sand.u32 %s25, 1
        %s429 = scalar_lea.sflag [#allocation5], %s428
        %s430 = sand.u32 %s113, 1
        %s431 = smul.addr %s430, 8
        %s432 = scalar_lea.vmem [#allocation6], %s431
        %p433 = pneg %p126
        %p434 = pneg %p123
        %p435 = pneg %p147
        %p436 = pneg %p144
        %p437 = pneg %p168
        %p438 = pneg %p165
        %p439 = pneg %p189
        %p440 = pneg %p186
        %p441 = pneg %p210
        %p442 = pneg %p207
        %p443 = pneg %p231
        %p444 = pneg %p228
        %p445 = pneg %p259
        %p446 = pneg %p256
        %s447 = smul.u32 8, %s30
        %p448 = scmp.lt.s32.totalorder %s29, 1
        %s449 = scalar_select %p448, %s29, 1
        %p450 = scmp.lt.s32.totalorder %s447, 31
        %s451 = scalar_select %p450, %s447, 31
        %s452 = smul.addr %s451, 2
        %s453 = smul.addr %s449, 64
        %s454 = sadd.s32 %s452, %s453
        %s455 = smul.addr %s454, 8
        %s456 = scalar_lea.vmem %s8, %s455
        %s457 = smul.u32 8, %s30
        %s458 = ssub.s32 36, %s457
        %p459 = scmp.lt.s32.totalorder %s458, 8
        %s460 = scalar_select %p459, %s458, 8
        %s461 = smul.u32 4, %s460
        %s462 = sadd.s32 %s30, 1
        %s463 = smul.u32 %s462, 4
        %s464 = smul.u32 2, %s463
        %s465 = sadd.s32 %s30, 1
        %s466 = smul.u32 %s465, 4
        %s467 = sadd.s32 %s466, 1
        %s468 = smul.u32 2, %s467
        %s469 = smul.u32 8, %s30
        %p470 = scmp.lt.s32.totalorder %s29, 1
        %s471 = scalar_select %p470, %s29, 1
        %p472 = scmp.lt.s32.totalorder %s469, 31
        %s473 = scalar_select %p472, %s469, 31
        %s474 = smul.addr %s473, 2
        %s475 = smul.addr %s471, 64
        %s476 = sadd.s32 %s474, %s475
        %s477 = smul.addr %s476, 8
        %s478 = scalar_lea.vmem %s8, %s477
        %s479 = smul.u32 8, %s30
        %v480 = vld [vmem:[%s388] sm:$0xf]
        %v481 = vld [vmem:[%s388 + $0x4] sm:$0xf]
        %v482 = vld [vmem:[%s388 + $0x8] sm:$0xf]
        %v483 = vld [vmem:[%s388 + $0xc] sm:$0xf]
        %v484 = vld [vmem:[%s388 + $0x10] sm:$0xf]
        %v485 = vld [vmem:[%s388 + $0x14] sm:$0xf]
        %v486 = vld [vmem:[%s388 + $0x18] sm:$0xf]
        %v487 = vld [vmem:[%s388 + $0x1c] sm:$0xf]
        %v488 = vld [vmem:[%s398] sm:$0xf]
        %v489 = vld [vmem:[%s398 + $0x4] sm:$0xf]
        %v490 = vld [vmem:[%s408] sm:$0xf]
        %v491 = vld [vmem:[%s408 + $0x4] sm:$0xf]
        %v492 = vld [vmem:[%s3] sm:$0xff]
        %v493 = vld [vmem:[%s3 + $0x8] sm:$0xff]
        %v494 = vld [vmem:[%s3 + $0x10] sm:$0xff]
        %v495 = vld [vmem:[%s3 + $0x18] sm:$0xff]
        %v496 = vld [vmem:[%s3 + $0x20] sm:$0xff]
        %v497 = vld [vmem:[%s3 + $0x28] sm:$0xff]
        %v498 = vld [vmem:[%s3 + $0x30] sm:$0xff]
        %v499 = vld [vmem:[%s3 + $0x38] sm:$0xff]
        %v500 = vld [vmem:[%s3 + $0x40] sm:$0xff]
        %v501 = vld [vmem:[%s3 + $0x48] sm:$0xff]
        %v502 = vld [vmem:[%s3 + $0x50] sm:$0xff]
        %v503 = vld [vmem:[%s3 + $0x58] sm:$0xff]
        %v504 = vld [vmem:[%s3 + $0x60] sm:$0xff]
        %v505 = vld [vmem:[%s3 + $0x68] sm:$0xff]
        %v506 = vld [vmem:[%s3 + $0x70] sm:$0xff]
        %v507 = vld [vmem:[%s3 + $0x78] sm:$0xff]
        %v514 = vunpack.c.l.b16 %v482
        %v515 = vunpack.c.l.b16 %v483
        %v516 = vunpack.c.l.b16 %v484
        %v517 = vunpack.c.l.b16 %v485
        %v518 = vunpack.c.l.b16 %v486
        %v519 = vunpack.c.l.b16 %v487
        %v520 = vpack.c.b16 %v515, %v514
        %v521 = vpack.c.b16 %v517, %v516
        %v522 = vpack.c.b16 %v519, %v518
        %v528 = vunpack.c.l.b16 %v488
        %v529 = vunpack.c.l.b16 %v489
        %v530 = vpack.c.b16 %v529, %v528
        %s532 = scalar_lea.vmem %s3, 128
        %v533 = vld [vmem:[%s532] sm:$0xff]
        %v534 = vld [vmem:[%s532 + $0x8] sm:$0xff]
        %v535 = vld [vmem:[%s532 + $0x10] sm:$0xff]
        %v536 = vld [vmem:[%s532 + $0x18] sm:$0xff]
        %v537 = vld [vmem:[%s532 + $0x20] sm:$0xff]
        %v538 = vld [vmem:[%s532 + $0x28] sm:$0xff]
        %v539 = vld [vmem:[%s532 + $0x30] sm:$0xff]
        %v540 = vld [vmem:[%s532 + $0x38] sm:$0xff]
        %v541 = vld [vmem:[%s532 + $0x40] sm:$0xff]
        %v542 = vld [vmem:[%s532 + $0x48] sm:$0xff]
        %v543 = vld [vmem:[%s532 + $0x50] sm:$0xff]
        %v544 = vld [vmem:[%s532 + $0x58] sm:$0xff]
        %v545 = vld [vmem:[%s532 + $0x60] sm:$0xff]
        %v546 = vld [vmem:[%s532 + $0x68] sm:$0xff]
        %v547 = vld [vmem:[%s532 + $0x70] sm:$0xff]
        %v548 = vld [vmem:[%s532 + $0x78] sm:$0xff]
        %v565 = vunpack.c.l.b16 %v533
        %v566 = vunpack.c.h.b16 %v533
        %v567 = vunpack.c.l.b16 %v534
        %v568 = vunpack.c.h.b16 %v534
        %v569 = vunpack.c.l.b16 %v535
        %v570 = vunpack.c.h.b16 %v535
        %v571 = vunpack.c.l.b16 %v536
        %v572 = vunpack.c.h.b16 %v536
        %v573 = vunpack.c.l.b16 %v537
        %v574 = vunpack.c.h.b16 %v537
        %v575 = vunpack.c.l.b16 %v538
        %v576 = vunpack.c.h.b16 %v538
        %v577 = vunpack.c.l.b16 %v539
        %v578 = vunpack.c.h.b16 %v539
        %v579 = vunpack.c.l.b16 %v540
        %v580 = vunpack.c.h.b16 %v540
        %v581 = vunpack.c.l.b16 %v541
        %v582 = vunpack.c.h.b16 %v541
        %v583 = vunpack.c.l.b16 %v542
        %v584 = vunpack.c.h.b16 %v542
        %v585 = vunpack.c.l.b16 %v543
        %v586 = vunpack.c.h.b16 %v543
        %v587 = vunpack.c.l.b16 %v544
        %v588 = vunpack.c.h.b16 %v544
        %v589 = vunpack.c.l.b16 %v545
        %v590 = vunpack.c.h.b16 %v545
        %v591 = vunpack.c.l.b16 %v546
        %v592 = vunpack.c.h.b16 %v546
        %v593 = vunpack.c.l.b16 %v547
        %v594 = vunpack.c.h.b16 %v547
        %v595 = vunpack.c.l.b16 %v548
        %v596 = vunpack.c.h.b16 %v548
        %v597 = vpack.c.b16 %v567, %v565
        %v598 = vpack.c.b16 %v568, %v566
        %v599 = vpack.c.b16 %v571, %v569
        %v600 = vpack.c.b16 %v572, %v570
        %v601 = vpack.c.b16 %v575, %v573
        %v602 = vpack.c.b16 %v576, %v574
        %v603 = vpack.c.b16 %v579, %v577
        %v604 = vpack.c.b16 %v580, %v578
        %v605 = vpack.c.b16 %v583, %v581
        %v606 = vpack.c.b16 %v584, %v582
        %v607 = vpack.c.b16 %v587, %v585
        %v608 = vpack.c.b16 %v588, %v586
        %v609 = vpack.c.b16 %v591, %v589
        %v610 = vpack.c.b16 %v592, %v590
        %v611 = vpack.c.b16 %v595, %v593
        %v612 = vpack.c.b16 %v596, %v594
        %629 = vmatpush.bf16.msra.mxu0 %v611
        %630 = vmatpush.bf16.msra.mxu0 %v609
        %631 = vmatpush.bf16.msra.mxu0 %v607
        %632 = vmatpush.bf16.msra.mxu0 %v605
        %633 = vmatpush.bf16.msra.mxu0 %v603
        %634 = vmatpush.bf16.msra.mxu0 %v601
        %635 = vmatpush.bf16.msra.mxu0 %v599
        %636 = vmatpush.bf16.msra.mxu0 %v597
        %637 = vmatmul.bf16.gmra.mxu0 %v520
        %v638 = vpop.f32.mrf.mxu0
        %v639 = vadd.f32 0.0, %v638
        %v640 = vpop.f32.mrf.mxu0
        %v641 = vadd.f32 0.0, %v640
        %642 = vmatmul.bf16.gmra.mxu0 %v521
        %v643 = vpop.f32.mrf.mxu0
        %v644 = vadd.f32 0.0, %v643
        %v645 = vpop.f32.mrf.mxu0
        %v646 = vadd.f32 0.0, %v645
        %647 = vmatmul.bf16.gmra.mxu0 %v522
        %v648 = vpop.f32.mrf.mxu0
        %v649 = vadd.f32 0.0, %v648
        %v650 = vpop.f32.mrf.mxu0
        %v651 = vadd.f32 0.0, %v650
        %652 = vmatmul.bf16.gmra.mxu0 %v530
        %v653 = vpop.f32.mrf.mxu0
        %v654 = vadd.f32 0.0, %v653
        %v655 = vpop.f32.mrf.mxu0
        %v656 = vadd.f32 0.0, %v655
        %657 = vdwg.mxu0
        %658 = vmatpush.bf16.msra.mxu0 %v612
        %659 = vmatpush.bf16.msra.mxu0 %v610
        %660 = vmatpush.bf16.msra.mxu0 %v608
        %661 = vmatpush.bf16.msra.mxu0 %v606
        %662 = vmatpush.bf16.msra.mxu0 %v604
        %663 = vmatpush.bf16.msra.mxu0 %v602
        %664 = vmatpush.bf16.msra.mxu0 %v600
        %665 = vmatpush.bf16.msra.mxu0 %v598
        %666 = vmatmul.bf16.gmra.mxu0 %v520
        %v667 = vpop.f32.mrf.mxu0
        %v668 = vadd.f32 0.0, %v667
        %v669 = vpop.f32.mrf.mxu0
        %v670 = vadd.f32 0.0, %v669
        %671 = vmatmul.bf16.gmra.mxu0 %v521
        %v672 = vpop.f32.mrf.mxu0
        %v673 = vadd.f32 0.0, %v672
        %v674 = vpop.f32.mrf.mxu0
        %v675 = vadd.f32 0.0, %v674
        %676 = vmatmul.bf16.gmra.mxu0 %v522
        %v677 = vpop.f32.mrf.mxu0
        %v678 = vadd.f32 0.0, %v677
        %v679 = vpop.f32.mrf.mxu0
        %v680 = vadd.f32 0.0, %v679
        %681 = vmatmul.bf16.gmra.mxu0 %v530
        %v682 = vpop.f32.mrf.mxu0
        %v683 = vadd.f32 0.0, %v682
        %v684 = vpop.f32.mrf.mxu0
        %v685 = vadd.f32 0.0, %v684
        %686 = vdwg.mxu0
        %v689 = vunpack.c.l.b16 %v480
        %v690 = vunpack.c.l.b16 %v481
        %v691 = vpack.c.b16 %v690, %v689
        %v709 = vunpack.c.l.b16 %v492
        %v710 = vunpack.c.h.b16 %v492
        %v711 = vunpack.c.l.b16 %v493
        %v712 = vunpack.c.h.b16 %v493
        %v713 = vunpack.c.l.b16 %v494
        %v714 = vunpack.c.h.b16 %v494
        %v715 = vunpack.c.l.b16 %v495
        %v716 = vunpack.c.h.b16 %v495
        %v717 = vunpack.c.l.b16 %v496
        %v718 = vunpack.c.h.b16 %v496
        %v719 = vunpack.c.l.b16 %v497
        %v720 = vunpack.c.h.b16 %v497
        %v721 = vunpack.c.l.b16 %v498
        %v722 = vunpack.c.h.b16 %v498
        %v723 = vunpack.c.l.b16 %v499
        %v724 = vunpack.c.h.b16 %v499
        %v725 = vunpack.c.l.b16 %v500
        %v726 = vunpack.c.h.b16 %v500
        %v727 = vunpack.c.l.b16 %v501
        %v728 = vunpack.c.h.b16 %v501
        %v729 = vunpack.c.l.b16 %v502
        %v730 = vunpack.c.h.b16 %v502
        %v731 = vunpack.c.l.b16 %v503
        %v732 = vunpack.c.h.b16 %v503
        %v733 = vunpack.c.l.b16 %v504
        %v734 = vunpack.c.h.b16 %v504
        %v735 = vunpack.c.l.b16 %v505
        %v736 = vunpack.c.h.b16 %v505
        %v737 = vunpack.c.l.b16 %v506
        %v738 = vunpack.c.h.b16 %v506
        %v739 = vunpack.c.l.b16 %v507
        %v740 = vunpack.c.h.b16 %v507
        %v741 = vpack.c.b16 %v711, %v709
        %v742 = vpack.c.b16 %v712, %v710
        %v743 = vpack.c.b16 %v715, %v713
        %v744 = vpack.c.b16 %v716, %v714
        %v745 = vpack.c.b16 %v719, %v717
        %v746 = vpack.c.b16 %v720, %v718
        %v747 = vpack.c.b16 %v723, %v721
        %v748 = vpack.c.b16 %v724, %v722
        %v749 = vpack.c.b16 %v727, %v725
        %v750 = vpack.c.b16 %v728, %v726
        %v751 = vpack.c.b16 %v731, %v729
        %v752 = vpack.c.b16 %v732, %v730
        %v753 = vpack.c.b16 %v735, %v733
        %v754 = vpack.c.b16 %v736, %v734
        %v755 = vpack.c.b16 %v739, %v737
        %v756 = vpack.c.b16 %v740, %v738
        %773 = vmatpush.bf16.msra.mxu0 %v755
        %774 = vmatpush.bf16.msra.mxu0 %v753
        %775 = vmatpush.bf16.msra.mxu0 %v751
        %776 = vmatpush.bf16.msra.mxu0 %v749
        %777 = vmatpush.bf16.msra.mxu0 %v747
        %778 = vmatpush.bf16.msra.mxu0 %v745
        %779 = vmatpush.bf16.msra.mxu0 %v743
        %780 = vmatpush.bf16.msra.mxu0 %v741
        %781 = vmatmul.bf16.gmra.mxu0 %v691
        %v782 = vpop.f32.mrf.mxu0
        %v783 = vadd.f32 %v639, %v782
        %v784 = vpop.f32.mrf.mxu0
        %v785 = vadd.f32 %v641, %v784
        %786 = vmatmul.bf16.gmra.mxu0 %v520
        %v787 = vpop.f32.mrf.mxu0
        %v788 = vadd.f32 %v644, %v787
        %v789 = vpop.f32.mrf.mxu0
        %v790 = vadd.f32 %v646, %v789
        %791 = vmatmul.bf16.gmra.mxu0 %v521
        %v792 = vpop.f32.mrf.mxu0
        %v793 = vadd.f32 %v649, %v792
        %v794 = vpop.f32.mrf.mxu0
        %v795 = vadd.f32 %v651, %v794
        %796 = vmatmul.bf16.gmra.mxu0 %v522
        %v797 = vpop.f32.mrf.mxu0
        %v798 = vadd.f32 %v654, %v797
        %v799 = vpop.f32.mrf.mxu0
        %v800 = vadd.f32 %v656, %v799
        %801 = vdwg.mxu0
        %802 = vmatpush.bf16.msra.mxu0 %v756
        %803 = vmatpush.bf16.msra.mxu0 %v754
        %804 = vmatpush.bf16.msra.mxu0 %v752
        %805 = vmatpush.bf16.msra.mxu0 %v750
        %806 = vmatpush.bf16.msra.mxu0 %v748
        %807 = vmatpush.bf16.msra.mxu0 %v746
        %808 = vmatpush.bf16.msra.mxu0 %v744
        %809 = vmatpush.bf16.msra.mxu0 %v742
        %810 = vmatmul.bf16.gmra.mxu0 %v691
        %v811 = vpop.f32.mrf.mxu0
        %v812 = vadd.f32 %v668, %v811
        %v813 = vpop.f32.mrf.mxu0
        %v814 = vadd.f32 %v670, %v813
        %815 = vmatmul.bf16.gmra.mxu0 %v520
        %v816 = vpop.f32.mrf.mxu0
        %v817 = vadd.f32 %v673, %v816
        %v818 = vpop.f32.mrf.mxu0
        %v819 = vadd.f32 %v675, %v818
        %820 = vmatmul.bf16.gmra.mxu0 %v521
        %v821 = vpop.f32.mrf.mxu0
        %v822 = vadd.f32 %v678, %v821
        %v823 = vpop.f32.mrf.mxu0
        %v824 = vadd.f32 %v680, %v823
        %825 = vmatmul.bf16.gmra.mxu0 %v522
        %v826 = vpop.f32.mrf.mxu0
        %v827 = vadd.f32 %v683, %v826
        %v828 = vpop.f32.mrf.mxu0
        %v829 = vadd.f32 %v685, %v828
        %830 = vdwg.mxu0
        %v833 = vunpack.c.l.b16 %v490
        %v834 = vunpack.c.l.b16 %v491
        %v835 = vpack.c.b16 %v834, %v833
        %s837 = scalar_lea.vmem %s3, 256
        %v838 = vld [vmem:[%s837] sm:$0xff]
        %v839 = vld [vmem:[%s837 + $0x8] sm:$0xff]
        %v840 = vld [vmem:[%s837 + $0x10] sm:$0xff]
        %v841 = vld [vmem:[%s837 + $0x18] sm:$0xff]
        %v842 = vld [vmem:[%s837 + $0x20] sm:$0xff]
        %v843 = vld [vmem:[%s837 + $0x28] sm:$0xff]
        %v844 = vld [vmem:[%s837 + $0x30] sm:$0xff]
        %v845 = vld [vmem:[%s837 + $0x38] sm:$0xff]
        %v846 = vld [vmem:[%s837 + $0x40] sm:$0xff]
        %v847 = vld [vmem:[%s837 + $0x48] sm:$0xff]
        %v848 = vld [vmem:[%s837 + $0x50] sm:$0xff]
        %v849 = vld [vmem:[%s837 + $0x58] sm:$0xff]
        %v850 = vld [vmem:[%s837 + $0x60] sm:$0xff]
        %v851 = vld [vmem:[%s837 + $0x68] sm:$0xff]
        %v852 = vld [vmem:[%s837 + $0x70] sm:$0xff]
        %v853 = vld [vmem:[%s837 + $0x78] sm:$0xff]
        %v870 = vunpack.c.l.b16 %v838
        %v871 = vunpack.c.h.b16 %v838
        %v872 = vunpack.c.l.b16 %v839
        %v873 = vunpack.c.h.b16 %v839
        %v874 = vunpack.c.l.b16 %v840
        %v875 = vunpack.c.h.b16 %v840
        %v876 = vunpack.c.l.b16 %v841
        %v877 = vunpack.c.h.b16 %v841
        %v878 = vunpack.c.l.b16 %v842
        %v879 = vunpack.c.h.b16 %v842
        %v880 = vunpack.c.l.b16 %v843
        %v881 = vunpack.c.h.b16 %v843
        %v882 = vunpack.c.l.b16 %v844
        %v883 = vunpack.c.h.b16 %v844
        %v884 = vunpack.c.l.b16 %v845
        %v885 = vunpack.c.h.b16 %v845
        %v886 = vunpack.c.l.b16 %v846
        %v887 = vunpack.c.h.b16 %v846
        %v888 = vunpack.c.l.b16 %v847
        %v889 = vunpack.c.h.b16 %v847
        %v890 = vunpack.c.l.b16 %v848
        %v891 = vunpack.c.h.b16 %v848
        %v892 = vunpack.c.l.b16 %v849
        %v893 = vunpack.c.h.b16 %v849
        %v894 = vunpack.c.l.b16 %v850
        %v895 = vunpack.c.h.b16 %v850
        %v896 = vunpack.c.l.b16 %v851
        %v897 = vunpack.c.h.b16 %v851
        %v898 = vunpack.c.l.b16 %v852
        %v899 = vunpack.c.h.b16 %v852
        %v900 = vunpack.c.l.b16 %v853
        %v901 = vunpack.c.h.b16 %v853
        %v902 = vpack.c.b16 %v872, %v870
        %v903 = vpack.c.b16 %v873, %v871
        %v904 = vpack.c.b16 %v876, %v874
        %v905 = vpack.c.b16 %v877, %v875
        %v906 = vpack.c.b16 %v880, %v878
        %v907 = vpack.c.b16 %v881, %v879
        %v908 = vpack.c.b16 %v884, %v882
        %v909 = vpack.c.b16 %v885, %v883
        %v910 = vpack.c.b16 %v888, %v886
        %v911 = vpack.c.b16 %v889, %v887
        %v912 = vpack.c.b16 %v892, %v890
        %v913 = vpack.c.b16 %v893, %v891
        %v914 = vpack.c.b16 %v896, %v894
        %v915 = vpack.c.b16 %v897, %v895
        %v916 = vpack.c.b16 %v900, %v898
        %v917 = vpack.c.b16 %v901, %v899
        %934 = vmatpush.bf16.msra.mxu0 %v916
        %935 = vmatpush.bf16.msra.mxu0 %v914
        %936 = vmatpush.bf16.msra.mxu0 %v912
        %937 = vmatpush.bf16.msra.mxu0 %v910
        %938 = vmatpush.bf16.msra.mxu0 %v908
        %939 = vmatpush.bf16.msra.mxu0 %v906
        %940 = vmatpush.bf16.msra.mxu0 %v904
        %941 = vmatpush.bf16.msra.mxu0 %v902
        %942 = vmatmul.bf16.gmra.mxu0 %v521
        %v943 = vpop.f32.mrf.mxu0
        %v944 = vadd.f32 0.0, %v943
        %v945 = vpop.f32.mrf.mxu0
        %v946 = vadd.f32 0.0, %v945
        %947 = vmatmul.bf16.gmra.mxu0 %v522
        %v948 = vpop.f32.mrf.mxu0
        %v949 = vadd.f32 0.0, %v948
        %v950 = vpop.f32.mrf.mxu0
        %v951 = vadd.f32 0.0, %v950
        %952 = vmatmul.bf16.gmra.mxu0 %v530
        %v953 = vpop.f32.mrf.mxu0
        %v954 = vadd.f32 0.0, %v953
        %v955 = vpop.f32.mrf.mxu0
        %v956 = vadd.f32 0.0, %v955
        %957 = vmatmul.bf16.gmra.mxu0 %v835
        %v958 = vpop.f32.mrf.mxu0
        %v959 = vadd.f32 0.0, %v958
        %v960 = vpop.f32.mrf.mxu0
        %v961 = vadd.f32 0.0, %v960
        %962 = vdwg.mxu0
        %963 = vmatpush.bf16.msra.mxu0 %v917
        %964 = vmatpush.bf16.msra.mxu0 %v915
        %965 = vmatpush.bf16.msra.mxu0 %v913
        %966 = vmatpush.bf16.msra.mxu0 %v911
        %967 = vmatpush.bf16.msra.mxu0 %v909
        %968 = vmatpush.bf16.msra.mxu0 %v907
        %969 = vmatpush.bf16.msra.mxu0 %v905
        %970 = vmatpush.bf16.msra.mxu0 %v903
        %971 = vmatmul.bf16.gmra.mxu0 %v521
        %v972 = vpop.f32.mrf.mxu0
        %v973 = vadd.f32 0.0, %v972
        %v974 = vpop.f32.mrf.mxu0
        %v975 = vadd.f32 0.0, %v974
        %976 = vmatmul.bf16.gmra.mxu0 %v522
        %v977 = vpop.f32.mrf.mxu0
        %v978 = vadd.f32 0.0, %v977
        %v979 = vpop.f32.mrf.mxu0
        %v980 = vadd.f32 0.0, %v979
        %981 = vmatmul.bf16.gmra.mxu0 %v530
        %v982 = vpop.f32.mrf.mxu0
        %v983 = vadd.f32 0.0, %v982
        %v984 = vpop.f32.mrf.mxu0
        %v985 = vadd.f32 0.0, %v984
        %986 = vmatmul.bf16.gmra.mxu0 %v835
        %v987 = vpop.f32.mrf.mxu0
        %v988 = vadd.f32 0.0, %v987
        %v989 = vpop.f32.mrf.mxu0
        %v990 = vadd.f32 0.0, %v989
        %991 = vdwg.mxu0
        %v992 = vadd.f32 %v783, %v944
        %v993 = vadd.f32 %v812, %v973
        %v994 = vadd.f32 %v785, %v946
        %v995 = vadd.f32 %v814, %v975
        %v996 = vadd.f32 %v788, %v949
        %v997 = vadd.f32 %v817, %v978
        %v998 = vadd.f32 %v790, %v951
        %v999 = vadd.f32 %v819, %v980
        %v1000 = vadd.f32 %v793, %v954
        %v1001 = vadd.f32 %v822, %v983
        %v1002 = vadd.f32 %v795, %v956
        %v1003 = vadd.f32 %v824, %v985
        %v1004 = vadd.f32 %v798, %v959
        %v1005 = vadd.f32 %v827, %v988
        %v1006 = vadd.f32 %v800, %v961
        %v1007 = vadd.f32 %v829, %v990
        %v1008 = vld [vmem:[%s4] sm:$0x3]
        %v1010 = vperm.slane %v1008, 0
        %v1011 = vperm.slane %v1008, 1
        %v1014 = vadd.f32 %v992, %v1010
        %v1015 = vadd.f32 %v993, %v1011
        %v1016 = vadd.f32 %v994, %v1010
        %v1017 = vadd.f32 %v995, %v1011
        %v1018 = vadd.f32 %v996, %v1010
        %v1019 = vadd.f32 %v997, %v1011
        %v1020 = vadd.f32 %v998, %v1010
        %v1021 = vadd.f32 %v999, %v1011
        %v1022 = vadd.f32 %v1000, %v1010
        %v1023 = vadd.f32 %v1001, %v1011
        %v1024 = vadd.f32 %v1002, %v1010
        %v1025 = vadd.f32 %v1003, %v1011
        %v1026 = vadd.f32 %v1004, %v1010
        %v1027 = vadd.f32 %v1005, %v1011
        %v1028 = vadd.f32 %v1006, %v1010
        %v1029 = vadd.f32 %v1007, %v1011
        %v1030 = vmax.f32 %v1014, 0.0
        %v1031 = vmax.f32 %v1015, 0.0
        %v1032 = vmax.f32 %v1016, 0.0
        %v1033 = vmax.f32 %v1017, 0.0
        %v1034 = vmax.f32 %v1018, 0.0
        %v1035 = vmax.f32 %v1019, 0.0
        %v1036 = vmax.f32 %v1020, 0.0
        %v1037 = vmax.f32 %v1021, 0.0
        %v1038 = vmax.f32 %v1022, 0.0
        %v1039 = vmax.f32 %v1023, 0.0
        %v1040 = vmax.f32 %v1024, 0.0
        %v1041 = vmax.f32 %v1025, 0.0
        %v1042 = vmax.f32 %v1026, 0.0
        %v1043 = vmax.f32 %v1027, 0.0
        %v1044 = vmax.f32 %v1028, 0.0
        %v1045 = vmax.f32 %v1029, 0.0
        %v1046 = vpack.c.bf16 %v1032, %v1030
        %v1047 = vpack.c.bf16 %v1033, %v1031
        %v1048 = vpack.c.bf16 %v1036, %v1034
        %v1049 = vpack.c.bf16 %v1037, %v1035
        %v1050 = vpack.c.bf16 %v1040, %v1038
        %v1051 = vpack.c.bf16 %v1041, %v1039
        %v1052 = vpack.c.bf16 %v1044, %v1042
        %v1053 = vpack.c.bf16 %v1045, %v1043
        %v1054 = vld [vmem:[%s5] sm:$0xff]
        %v1055 = vld [vmem:[%s5 + $0x8] sm:$0xff]
        %v1056 = vld [vmem:[%s5 + $0x10] sm:$0xff]
        %v1057 = vld [vmem:[%s5 + $0x18] sm:$0xff]
        %v1058 = vld [vmem:[%s5 + $0x20] sm:$0xff]
        %v1059 = vld [vmem:[%s5 + $0x28] sm:$0xff]
        %v1060 = vld [vmem:[%s5 + $0x30] sm:$0xff]
        %v1061 = vld [vmem:[%s5 + $0x38] sm:$0xff]
        %v1062 = vld [vmem:[%s5 + $0x40] sm:$0xff]
        %v1063 = vld [vmem:[%s5 + $0x48] sm:$0xff]
        %v1064 = vld [vmem:[%s5 + $0x50] sm:$0xff]
        %v1065 = vld [vmem:[%s5 + $0x58] sm:$0xff]
        %v1066 = vld [vmem:[%s5 + $0x60] sm:$0xff]
        %v1067 = vld [vmem:[%s5 + $0x68] sm:$0xff]
        %v1068 = vld [vmem:[%s5 + $0x70] sm:$0xff]
        %v1069 = vld [vmem:[%s5 + $0x78] sm:$0xff]
        %v1070 = vld [vmem:[%s5 + $0x80] sm:$0xff]
        %v1071 = vld [vmem:[%s5 + $0x88] sm:$0xff]
        %v1072 = vld [vmem:[%s5 + $0x90] sm:$0xff]
        %v1073 = vld [vmem:[%s5 + $0x98] sm:$0xff]
        %v1074 = vld [vmem:[%s5 + $0xa0] sm:$0xff]
        %v1075 = vld [vmem:[%s5 + $0xa8] sm:$0xff]
        %v1076 = vld [vmem:[%s5 + $0xb0] sm:$0xff]
        %v1077 = vld [vmem:[%s5 + $0xb8] sm:$0xff]
        %v1078 = vld [vmem:[%s5 + $0xc0] sm:$0xff]
        %v1079 = vld [vmem:[%s5 + $0xc8] sm:$0xff]
        %v1080 = vld [vmem:[%s5 + $0xd0] sm:$0xff]
        %v1081 = vld [vmem:[%s5 + $0xd8] sm:$0xff]
        %v1082 = vld [vmem:[%s5 + $0xe0] sm:$0xff]
        %v1083 = vld [vmem:[%s5 + $0xe8] sm:$0xff]
        %v1084 = vld [vmem:[%s5 + $0xf0] sm:$0xff]
        %v1085 = vld [vmem:[%s5 + $0xf8] sm:$0xff]
        %v1086 = vld [vmem:[%s6] sm:$0x3]
        %v1088 = vperm.slane %v1086, 0
        %v1089 = vperm.slane %v1086, 1
        %v1124 = vunpack.c.l.b16 %v1054
        %v1125 = vunpack.c.h.b16 %v1054
        %v1126 = vunpack.c.l.b16 %v1055
        %v1127 = vunpack.c.h.b16 %v1055
        %v1128 = vunpack.c.l.b16 %v1056
        %v1129 = vunpack.c.h.b16 %v1056
        %v1130 = vunpack.c.l.b16 %v1057
        %v1131 = vunpack.c.h.b16 %v1057
        %v1132 = vunpack.c.l.b16 %v1058
        %v1133 = vunpack.c.h.b16 %v1058
        %v1134 = vunpack.c.l.b16 %v1059
        %v1135 = vunpack.c.h.b16 %v1059
        %v1136 = vunpack.c.l.b16 %v1060
        %v1137 = vunpack.c.h.b16 %v1060
        %v1138 = vunpack.c.l.b16 %v1061
        %v1139 = vunpack.c.h.b16 %v1061
        %v1140 = vunpack.c.l.b16 %v1062
        %v1141 = vunpack.c.h.b16 %v1062
        %v1142 = vunpack.c.l.b16 %v1063
        %v1143 = vunpack.c.h.b16 %v1063
        %v1144 = vunpack.c.l.b16 %v1064
        %v1145 = vunpack.c.h.b16 %v1064
        %v1146 = vunpack.c.l.b16 %v1065
        %v1147 = vunpack.c.h.b16 %v1065
        %v1148 = vunpack.c.l.b16 %v1066
        %v1149 = vunpack.c.h.b16 %v1066
        %v1150 = vunpack.c.l.b16 %v1067
        %v1151 = vunpack.c.h.b16 %v1067
        %v1152 = vunpack.c.l.b16 %v1068
        %v1153 = vunpack.c.h.b16 %v1068
        %v1154 = vunpack.c.l.b16 %v1069
        %v1155 = vunpack.c.h.b16 %v1069
        %v1156 = vunpack.c.l.b16 %v1070
        %v1157 = vunpack.c.h.b16 %v1070
        %v1158 = vunpack.c.l.b16 %v1071
        %v1159 = vunpack.c.h.b16 %v1071
        %v1160 = vunpack.c.l.b16 %v1072
        %v1161 = vunpack.c.h.b16 %v1072
        %v1162 = vunpack.c.l.b16 %v1073
        %v1163 = vunpack.c.h.b16 %v1073
        %v1164 = vunpack.c.l.b16 %v1074
        %v1165 = vunpack.c.h.b16 %v1074
        %v1166 = vunpack.c.l.b16 %v1075
        %v1167 = vunpack.c.h.b16 %v1075
        %v1168 = vunpack.c.l.b16 %v1076
        %v1169 = vunpack.c.h.b16 %v1076
        %v1170 = vunpack.c.l.b16 %v1077
        %v1171 = vunpack.c.h.b16 %v1077
        %v1172 = vunpack.c.l.b16 %v1078
        %v1173 = vunpack.c.h.b16 %v1078
        %v1174 = vunpack.c.l.b16 %v1079
        %v1175 = vunpack.c.h.b16 %v1079
        %v1176 = vunpack.c.l.b16 %v1080
        %v1177 = vunpack.c.h.b16 %v1080
        %v1178 = vunpack.c.l.b16 %v1081
        %v1179 = vunpack.c.h.b16 %v1081
        %v1180 = vunpack.c.l.b16 %v1082
        %v1181 = vunpack.c.h.b16 %v1082
        %v1182 = vunpack.c.l.b16 %v1083
        %v1183 = vunpack.c.h.b16 %v1083
        %v1184 = vunpack.c.l.b16 %v1084
        %v1185 = vunpack.c.h.b16 %v1084
        %v1186 = vunpack.c.l.b16 %v1085
        %v1187 = vunpack.c.h.b16 %v1085
        %v1188 = vpack.c.b16 %v1126, %v1124
        %v1189 = vpack.c.b16 %v1127, %v1125
        %v1190 = vpack.c.b16 %v1130, %v1128
        %v1191 = vpack.c.b16 %v1131, %v1129
        %v1192 = vpack.c.b16 %v1134, %v1132
        %v1193 = vpack.c.b16 %v1135, %v1133
        %v1194 = vpack.c.b16 %v1138, %v1136
        %v1195 = vpack.c.b16 %v1139, %v1137
        %v1196 = vpack.c.b16 %v1142, %v1140
        %v1197 = vpack.c.b16 %v1143, %v1141
        %v1198 = vpack.c.b16 %v1146, %v1144
        %v1199 = vpack.c.b16 %v1147, %v1145
        %v1200 = vpack.c.b16 %v1150, %v1148
        %v1201 = vpack.c.b16 %v1151, %v1149
        %v1202 = vpack.c.b16 %v1154, %v1152
        %v1203 = vpack.c.b16 %v1155, %v1153
        %v1204 = vpack.c.b16 %v1158, %v1156
        %v1205 = vpack.c.b16 %v1159, %v1157
        %v1206 = vpack.c.b16 %v1162, %v1160
        %v1207 = vpack.c.b16 %v1163, %v1161
        %v1208 = vpack.c.b16 %v1166, %v1164
        %v1209 = vpack.c.b16 %v1167, %v1165
        %v1210 = vpack.c.b16 %v1170, %v1168
        %v1211 = vpack.c.b16 %v1171, %v1169
        %v1212 = vpack.c.b16 %v1174, %v1172
        %v1213 = vpack.c.b16 %v1175, %v1173
        %v1214 = vpack.c.b16 %v1178, %v1176
        %v1215 = vpack.c.b16 %v1179, %v1177
        %v1216 = vpack.c.b16 %v1182, %v1180
        %v1217 = vpack.c.b16 %v1183, %v1181
        %v1218 = vpack.c.b16 %v1186, %v1184
        %v1219 = vpack.c.b16 %v1187, %v1185
        %1252 = vmatpush.bf16.msra.mxu0 %v1202
        %1253 = vmatpush.bf16.msra.mxu0 %v1200
        %1254 = vmatpush.bf16.msra.mxu0 %v1198
        %1255 = vmatpush.bf16.msra.mxu0 %v1196
        %1256 = vmatpush.bf16.msra.mxu0 %v1194
        %1257 = vmatpush.bf16.msra.mxu0 %v1192
        %1258 = vmatpush.bf16.msra.mxu0 %v1190
        %1259 = vmatpush.bf16.msra.mxu0 %v1188
        %1260 = vmatmul.bf16.gmra.mxu0 %v1046
        %v1261 = vpop.f32.mrf.mxu0
        %v1262 = vadd.f32 %v1088, %v1261
        %v1263 = vpop.f32.mrf.mxu0
        %v1264 = vadd.f32 %v1088, %v1263
        %1265 = vmatmul.bf16.gmra.mxu0 %v1048
        %v1266 = vpop.f32.mrf.mxu0
        %v1267 = vadd.f32 %v1088, %v1266
        %v1268 = vpop.f32.mrf.mxu0
        %v1269 = vadd.f32 %v1088, %v1268
        %1270 = vmatmul.bf16.gmra.mxu0 %v1050
        %v1271 = vpop.f32.mrf.mxu0
        %v1272 = vadd.f32 %v1088, %v1271
        %v1273 = vpop.f32.mrf.mxu0
        %v1274 = vadd.f32 %v1088, %v1273
        %1275 = vmatmul.bf16.gmra.mxu0 %v1052
        %v1276 = vpop.f32.mrf.mxu0
        %v1277 = vadd.f32 %v1088, %v1276
        %v1278 = vpop.f32.mrf.mxu0
        %v1279 = vadd.f32 %v1088, %v1278
        %1280 = vdwg.mxu0
        %1281 = vmatpush.bf16.msra.mxu0 %v1218
        %1282 = vmatpush.bf16.msra.mxu0 %v1216
        %1283 = vmatpush.bf16.msra.mxu0 %v1214
        %1284 = vmatpush.bf16.msra.mxu0 %v1212
        %1285 = vmatpush.bf16.msra.mxu0 %v1210
        %1286 = vmatpush.bf16.msra.mxu0 %v1208
        %1287 = vmatpush.bf16.msra.mxu0 %v1206
        %1288 = vmatpush.bf16.msra.mxu0 %v1204
        %1289 = vmatmul.bf16.gmra.mxu0 %v1047
        %v1290 = vpop.f32.mrf.mxu0
        %v1291 = vadd.f32 %v1262, %v1290
        %v1292 = vpop.f32.mrf.mxu0
        %v1293 = vadd.f32 %v1264, %v1292
        %1294 = vmatmul.bf16.gmra.mxu0 %v1049
        %v1295 = vpop.f32.mrf.mxu0
        %v1296 = vadd.f32 %v1267, %v1295
        %v1297 = vpop.f32.mrf.mxu0
        %v1298 = vadd.f32 %v1269, %v1297
        %1299 = vmatmul.bf16.gmra.mxu0 %v1051
        %v1300 = vpop.f32.mrf.mxu0
        %v1301 = vadd.f32 %v1272, %v1300
        %v1302 = vpop.f32.mrf.mxu0
        %v1303 = vadd.f32 %v1274, %v1302
        %1304 = vmatmul.bf16.gmra.mxu0 %v1053
        %v1305 = vpop.f32.mrf.mxu0
        %v1306 = vadd.f32 %v1277, %v1305
        %v1307 = vpop.f32.mrf.mxu0
        %v1308 = vadd.f32 %v1279, %v1307
        %1309 = vdwg.mxu0
        %1310 = vmatpush.bf16.msra.mxu0 %v1203
        %1311 = vmatpush.bf16.msra.mxu0 %v1201
        %1312 = vmatpush.bf16.msra.mxu0 %v1199
        %1313 = vmatpush.bf16.msra.mxu0 %v1197
        %1314 = vmatpush.bf16.msra.mxu0 %v1195
        %1315 = vmatpush.bf16.msra.mxu0 %v1193
        %1316 = vmatpush.bf16.msra.mxu0 %v1191
        %1317 = vmatpush.bf16.msra.mxu0 %v1189
        %1318 = vmatmul.bf16.gmra.mxu0 %v1046
        %v1319 = vpop.f32.mrf.mxu0
        %v1320 = vadd.f32 %v1089, %v1319
        %v1321 = vpop.f32.mrf.mxu0
        %v1322 = vadd.f32 %v1089, %v1321
        %1323 = vmatmul.bf16.gmra.mxu0 %v1048
        %v1324 = vpop.f32.mrf.mxu0
        %v1325 = vadd.f32 %v1089, %v1324
        %v1326 = vpop.f32.mrf.mxu0
        %v1327 = vadd.f32 %v1089, %v1326
        %1328 = vmatmul.bf16.gmra.mxu0 %v1050
        %v1329 = vpop.f32.mrf.mxu0
        %v1330 = vadd.f32 %v1089, %v1329
        %v1331 = vpop.f32.mrf.mxu0
        %v1332 = vadd.f32 %v1089, %v1331
        %1333 = vmatmul.bf16.gmra.mxu0 %v1052
        %v1334 = vpop.f32.mrf.mxu0
        %v1335 = vadd.f32 %v1089, %v1334
        %v1336 = vpop.f32.mrf.mxu0
        %v1337 = vadd.f32 %v1089, %v1336
        %1338 = vdwg.mxu0
        %1339 = vmatpush.bf16.msra.mxu0 %v1219
        %1340 = vmatpush.bf16.msra.mxu0 %v1217
        %1341 = vmatpush.bf16.msra.mxu0 %v1215
        %1342 = vmatpush.bf16.msra.mxu0 %v1213
        %1343 = vmatpush.bf16.msra.mxu0 %v1211
        %1344 = vmatpush.bf16.msra.mxu0 %v1209
        %1345 = vmatpush.bf16.msra.mxu0 %v1207
        %1346 = vmatpush.bf16.msra.mxu0 %v1205
        %1347 = vmatmul.bf16.gmra.mxu0 %v1047
        %v1348 = vpop.f32.mrf.mxu0
        %v1349 = vadd.f32 %v1320, %v1348
        %v1350 = vpop.f32.mrf.mxu0
        %v1351 = vadd.f32 %v1322, %v1350
        %1352 = vmatmul.bf16.gmra.mxu0 %v1049
        %v1353 = vpop.f32.mrf.mxu0
        %v1354 = vadd.f32 %v1325, %v1353
        %v1355 = vpop.f32.mrf.mxu0
        %v1356 = vadd.f32 %v1327, %v1355
        %1357 = vmatmul.bf16.gmra.mxu0 %v1051
        %v1358 = vpop.f32.mrf.mxu0
        %v1359 = vadd.f32 %v1330, %v1358
        %v1360 = vpop.f32.mrf.mxu0
        %v1361 = vadd.f32 %v1332, %v1360
        %1362 = vmatmul.bf16.gmra.mxu0 %v1053
        %v1363 = vpop.f32.mrf.mxu0
        %v1364 = vadd.f32 %v1335, %v1363
        %v1365 = vpop.f32.mrf.mxu0
        %v1366 = vadd.f32 %v1337, %v1365
        %1367 = vdwg.mxu0
        %v1368 = vld [vmem:[%s7] ss:$4 sm:$0x3]
        %s1369 = scalar_lea.vmem %s7, 1
        %v1370 = vld [vmem:[%s1369] ss:$4 sm:$0x3]
        %s1371 = scalar_lea.vmem %s7, 2
        %v1372 = vld [vmem:[%s1371] ss:$4 sm:$0x3]
        %s1373 = scalar_lea.vmem %s7, 3
        %v1374 = vld [vmem:[%s1373] ss:$4 sm:$0x3]
        %vm1375 = vcmp.gt.f32.partialorder %v1374, 0.5
        %v1376 = vmul.f32 %v1291, 1.442695
        %v1377 = vpow.pop %v1376
        %v1378 = vmul.f32 %v1349, 1.442695
        %v1379 = vpow.pop %v1378
        %v1380 = vmul.f32 %v1293, 1.442695
        %v1381 = vpow.pop %v1380
        %v1382 = vmul.f32 %v1351, 1.442695
        %v1383 = vpow.pop %v1382
        %v1384 = vmul.f32 %v1296, 1.442695
        %v1385 = vpow.pop %v1384
        %v1386 = vmul.f32 %v1354, 1.442695
        %v1387 = vpow.pop %v1386
        %v1388 = vmul.f32 %v1298, 1.442695
        %v1389 = vpow.pop %v1388
        %v1390 = vmul.f32 %v1356, 1.442695
        %v1391 = vpow.pop %v1390
        %v1392 = vmul.f32 %v1301, 1.442695
        %v1393 = vpow.pop %v1392
        %v1394 = vmul.f32 %v1359, 1.442695
        %v1395 = vpow.pop %v1394
        %v1396 = vmul.f32 %v1303, 1.442695
        %v1397 = vpow.pop %v1396
        %v1398 = vmul.f32 %v1361, 1.442695
        %v1399 = vpow.pop %v1398
        %v1400 = vmul.f32 %v1306, 1.442695
        %v1401 = vpow.pop %v1400
        %v1402 = vmul.f32 %v1364, 1.442695
        %v1403 = vpow.pop %v1402
        %v1404 = vmul.f32 %v1308, 1.442695
        %v1405 = vpow.pop %v1404
        %v1406 = vmul.f32 %v1366, 1.442695
        %v1407 = vpow.pop %v1406
        %v1408 = vsel %vm1375, 1, 0
        %v1409 = vperm.slane %v1408, 0
        %v1410 = vperm.slane %v1408, 1
        %vm1411 = vcmp.eq.s32.totalorder %v1409, 1
        %vm1412 = vcmp.eq.s32.totalorder %v1410, 1
        %v1413 = vsel %vm1411, %v1377, %v1291
        %v1414 = vsel %vm1412, %v1379, %v1349
        %v1415 = vsel %vm1411, %v1381, %v1293
        %v1416 = vsel %vm1412, %v1383, %v1351
        %v1417 = vsel %vm1411, %v1385, %v1296
        %v1418 = vsel %vm1412, %v1387, %v1354
        %v1419 = vsel %vm1411, %v1389, %v1298
        %v1420 = vsel %vm1412, %v1391, %v1356
        %v1421 = vsel %vm1411, %v1393, %v1301
        %v1422 = vsel %vm1412, %v1395, %v1359
        %v1423 = vsel %vm1411, %v1397, %v1303
        %v1424 = vsel %vm1412, %v1399, %v1361
        %v1425 = vsel %vm1411, %v1401, %v1306
        %v1426 = vsel %vm1412, %v1403, %v1364
        %v1427 = vsel %vm1411, %v1405, %v1308
        %v1428 = vsel %vm1412, %v1407, %v1366
        %v1429 = vlaneseq
        %v1430 = vshrl.u32 %v1429, 7
        %v1431 = vadd.s32 %v1430, 8
        %v1432 = vadd.s32 %v1430, 16
        %v1433 = vadd.s32 %v1430, 24
        %v1434 = vadd.s32 %v1430, 32
        %v1435 = vadd.s32 %v1430, 40
        %v1436 = vadd.s32 %v1430, 48
        %v1437 = vadd.s32 %v1430, 56
        %v1438 = vcvt.s32.f32 %v1430
        %v1439 = vcvt.s32.f32 %v1431
        %v1440 = vcvt.s32.f32 %v1432
        %v1441 = vcvt.s32.f32 %v1433
        %v1442 = vcvt.s32.f32 %v1434
        %v1443 = vcvt.s32.f32 %v1435
        %v1444 = vcvt.s32.f32 %v1436
        %v1445 = vcvt.s32.f32 %v1437
        %v1446 = vmul.f32 %v1438, 0.0625
        %v1447 = vmul.f32 %v1439, 0.0625
        %v1448 = vmul.f32 %v1440, 0.0625
        %v1449 = vmul.f32 %v1441, 0.0625
        %v1450 = vmul.f32 %v1442, 0.0625
        %v1451 = vmul.f32 %v1443, 0.0625
        %v1452 = vmul.f32 %v1444, 0.0625
        %v1453 = vmul.f32 %v1445, 0.0625
        %v1454 = vadd.f32 %v1446, 0.0001
        %v1455 = vadd.f32 %v1447, 0.0001
        %v1456 = vadd.f32 %v1448, 0.0001
        %v1457 = vadd.f32 %v1449, 0.0001
        %v1458 = vadd.f32 %v1450, 0.0001
        %v1459 = vadd.f32 %v1451, 0.0001
        %v1460 = vadd.f32 %v1452, 0.0001
        %v1461 = vadd.f32 %v1453, 0.0001
        %v1462 = vfloor.f32 %v1454
        %v1463 = vfloor.f32 %v1455
        %v1464 = vfloor.f32 %v1456
        %v1465 = vfloor.f32 %v1457
        %v1466 = vfloor.f32 %v1458
        %v1467 = vfloor.f32 %v1459
        %v1468 = vfloor.f32 %v1460
        %v1469 = vfloor.f32 %v1461
        %v1470 = vmul.f32 %v1462, 16.0
        %v1471 = vmul.f32 %v1463, 16.0
        %v1472 = vmul.f32 %v1464, 16.0
        %v1473 = vmul.f32 %v1465, 16.0
        %v1474 = vmul.f32 %v1466, 16.0
        %v1475 = vmul.f32 %v1467, 16.0
        %v1476 = vmul.f32 %v1468, 16.0
        %v1477 = vmul.f32 %v1469, 16.0
        %v1478 = vsub.f32 %v1438, %v1470
        %v1479 = vsub.f32 %v1439, %v1471
        %v1480 = vsub.f32 %v1440, %v1472
        %v1481 = vsub.f32 %v1441, %v1473
        %v1482 = vsub.f32 %v1442, %v1474
        %v1483 = vsub.f32 %v1443, %v1475
        %v1484 = vsub.f32 %v1444, %v1476
        %v1485 = vsub.f32 %v1445, %v1477
        %s1486 = smul.u32 %s30, 4
        %s1487 = scvt.s32.f32 %s1486
        %v1488 = vmul.f32 %v1478, 32.0
        %v1489 = vmul.f32 %v1479, 32.0
        %v1490 = vmul.f32 %v1480, 32.0
        %v1491 = vmul.f32 %v1481, 32.0
        %v1492 = vmul.f32 %v1482, 32.0
        %v1493 = vmul.f32 %v1483, 32.0
        %v1494 = vmul.f32 %v1484, 32.0
        %v1495 = vmul.f32 %v1485, 32.0
        %v1496 = vstv %s1487
        %v1497 = vadd.f32 %v1462, %v1496
        %v1498 = vadd.f32 %v1463, %v1496
        %v1499 = vadd.f32 %v1464, %v1496
        %v1500 = vadd.f32 %v1465, %v1496
        %v1501 = vadd.f32 %v1466, %v1496
        %v1502 = vadd.f32 %v1467, %v1496
        %v1503 = vadd.f32 %v1468, %v1496
        %v1504 = vadd.f32 %v1469, %v1496
        %v1505 = vmul.f32 %v1497, 32.0
        %v1506 = vmul.f32 %v1498, 32.0
        %v1507 = vmul.f32 %v1499, 32.0
        %v1508 = vmul.f32 %v1500, 32.0
        %v1509 = vmul.f32 %v1501, 32.0
        %v1510 = vmul.f32 %v1502, 32.0
        %v1511 = vmul.f32 %v1503, 32.0
        %v1512 = vmul.f32 %v1504, 32.0
        %v1514 = vperm.slane %v1368, 0
        %v1515 = vperm.slane %v1368, 1
        %v1518 = vmul.f32 %v1413, %v1514
        %v1519 = vmul.f32 %v1414, %v1515
        %v1520 = vmul.f32 %v1415, %v1514
        %v1521 = vmul.f32 %v1416, %v1515
        %v1522 = vmul.f32 %v1417, %v1514
        %v1523 = vmul.f32 %v1418, %v1515
        %v1524 = vmul.f32 %v1419, %v1514
        %v1525 = vmul.f32 %v1420, %v1515
        %v1526 = vmul.f32 %v1421, %v1514
        %v1527 = vmul.f32 %v1422, %v1515
        %v1528 = vmul.f32 %v1423, %v1514
        %v1529 = vmul.f32 %v1424, %v1515
        %v1530 = vmul.f32 %v1425, %v1514
        %v1531 = vmul.f32 %v1426, %v1515
        %v1532 = vmul.f32 %v1427, %v1514
        %v1533 = vmul.f32 %v1428, %v1515
        %v1535 = vperm.slane %v1370, 0
        %v1536 = vperm.slane %v1370, 1
        %v1539 = vmul.f32 %v1488, %v1535
        %v1540 = vmul.f32 %v1488, %v1536
        %v1541 = vmul.f32 %v1489, %v1535
        %v1542 = vmul.f32 %v1489, %v1536
        %v1543 = vmul.f32 %v1490, %v1535
        %v1544 = vmul.f32 %v1490, %v1536
        %v1545 = vmul.f32 %v1491, %v1535
        %v1546 = vmul.f32 %v1491, %v1536
        %v1547 = vmul.f32 %v1492, %v1535
        %v1548 = vmul.f32 %v1492, %v1536
        %v1549 = vmul.f32 %v1493, %v1535
        %v1550 = vmul.f32 %v1493, %v1536
        %v1551 = vmul.f32 %v1494, %v1535
        %v1552 = vmul.f32 %v1494, %v1536
        %v1553 = vmul.f32 %v1495, %v1535
        %v1554 = vmul.f32 %v1495, %v1536
        %v1555 = vadd.f32 %v1518, %v1539
        %v1556 = vadd.f32 %v1519, %v1540
        %v1557 = vadd.f32 %v1520, %v1541
        %v1558 = vadd.f32 %v1521, %v1542
        %v1559 = vadd.f32 %v1522, %v1543
        %v1560 = vadd.f32 %v1523, %v1544
        %v1561 = vadd.f32 %v1524, %v1545
        %v1562 = vadd.f32 %v1525, %v1546
        %v1563 = vadd.f32 %v1526, %v1547
        %v1564 = vadd.f32 %v1527, %v1548
        %v1565 = vadd.f32 %v1528, %v1549
        %v1566 = vadd.f32 %v1529, %v1550
        %v1567 = vadd.f32 %v1530, %v1551
        %v1568 = vadd.f32 %v1531, %v1552
        %v1569 = vadd.f32 %v1532, %v1553
        %v1570 = vadd.f32 %v1533, %v1554
        %v1572 = vperm.slane %v1372, 0
        %v1573 = vperm.slane %v1372, 1
        %v1576 = vmul.f32 %v1505, %v1572
        %v1577 = vmul.f32 %v1505, %v1573
        %v1578 = vmul.f32 %v1506, %v1572
        %v1579 = vmul.f32 %v1506, %v1573
        %v1580 = vmul.f32 %v1507, %v1572
        %v1581 = vmul.f32 %v1507, %v1573
        %v1582 = vmul.f32 %v1508, %v1572
        %v1583 = vmul.f32 %v1508, %v1573
        %v1584 = vmul.f32 %v1509, %v1572
        %v1585 = vmul.f32 %v1509, %v1573
        %v1586 = vmul.f32 %v1510, %v1572
        %v1587 = vmul.f32 %v1510, %v1573
        %v1588 = vmul.f32 %v1511, %v1572
        %v1589 = vmul.f32 %v1511, %v1573
        %v1590 = vmul.f32 %v1512, %v1572
        %v1591 = vmul.f32 %v1512, %v1573
        %v1592 = vadd.f32 %v1555, %v1576
        %v1593 = vadd.f32 %v1556, %v1577
        %v1594 = vadd.f32 %v1557, %v1578
        %v1595 = vadd.f32 %v1558, %v1579
        %v1596 = vadd.f32 %v1559, %v1580
        %v1597 = vadd.f32 %v1560, %v1581
        %v1598 = vadd.f32 %v1561, %v1582
        %v1599 = vadd.f32 %v1562, %v1583
        %v1600 = vadd.f32 %v1563, %v1584
        %v1601 = vadd.f32 %v1564, %v1585
        %v1602 = vadd.f32 %v1565, %v1586
        %v1603 = vadd.f32 %v1566, %v1587
        %v1604 = vadd.f32 %v1567, %v1588
        %v1605 = vadd.f32 %v1568, %v1589
        %v1606 = vadd.f32 %v1569, %v1590
        %v1607 = vadd.f32 %v1570, %v1591
        %1608 = vst [vmem:[%s478] sm:$0xff] %v1592
        %vm1609 = vcmask 56320
        %1610 = vst.msk [vmem:[%s478 + $0x8] sm:$0xff] %vm1609, %v1593
        %1611 = vst [vmem:[%s478 + $0x10] sm:$0xff] %v1594
        %1612 = vst.msk [vmem:[%s478 + $0x18] sm:$0xff] %vm1609, %v1595
        %1613 = vst [vmem:[%s478 + $0x20] sm:$0xff] %v1596
        %1614 = vst.msk [vmem:[%s478 + $0x28] sm:$0xff] %vm1609, %v1597
        %1615 = vst [vmem:[%s478 + $0x30] sm:$0xff] %v1598
        %1616 = vst.msk [vmem:[%s478 + $0x38] sm:$0xff] %vm1609, %v1599
        %1617 = vst [vmem:[%s478 + $0x40] sm:$0xff] %v1600
        %1618 = vst.msk [vmem:[%s478 + $0x48] sm:$0xff] %vm1609, %v1601
        %1619 = vst [vmem:[%s478 + $0x50] sm:$0xff] %v1602
        %1620 = vst.msk [vmem:[%s478 + $0x58] sm:$0xff] %vm1609, %v1603
        %1621 = vst [vmem:[%s478 + $0x60] sm:$0xff] %v1604
        %1622 = vst.msk [vmem:[%s478 + $0x68] sm:$0xff] %vm1609, %v1605
        %1623 = vst [vmem:[%s478 + $0x70] sm:$0xff] %v1606
        %1624 = vst.msk [vmem:[%s478 + $0x78] sm:$0xff] %vm1609, %v1607
        %s1625 = smul.u32 8, %s30
        %p1626 = scmp.lt.s32.totalorder %s29, 1
        %s1627 = scalar_select %p1626, %s29, 1
        %p1628 = scmp.lt.s32.totalorder %s1625, 31
        %s1629 = scalar_select %p1628, %s1625, 31
        %s1630 = smul.addr %s1629, 2
        %s1631 = smul.addr %s1627, 64
        %s1632 = sadd.s32 %s1630, %s1631
        %s1633 = smul.addr %s1632, 8
        %s1634 = scalar_lea.vmem %s8, %s1633
        // Predicated region
        $region65: #{tpu_custom_call.1} parent=51 // pred_check
          %p1635 = pneg %p256
        $region66: #{tpu_custom_call.1} parent=51 // pred_check_branch
          %1637 = sbr.rel (%p1635) target = $region68
        $region67: #{tpu_custom_call.1} parent=51 // pred_region
          %s1638 = smul.u32 8, %s30
        $region68: #{tpu_custom_call.1} parent=51 // pred_fallthru
          _
      $region52: #{tpu_custom_call.1} parent=5 // pred_fallthru
        _
      %p1639 = scmp.le.s32.totalorder 2, %s20
      // Predicated region
      $region69: #{tpu_custom_call.1} parent=5 // pred_check
        %p1640 = pneg %p1639
      $region70: #{tpu_custom_call.1} parent=5 // pred_check_branch
        %1642 = sbr.rel (%p1640) target = $region72
      $region71: #{tpu_custom_call.1} parent=5 // pred_region
        %s1643 = ssub.s32 %s20, 2
        // Predicated region
        $region73: #{tpu_custom_call.1} parent=71 // pred_check
          %p1644 = pneg %p262
        $region74: #{tpu_custom_call.1} parent=71 // pred_check_branch
          %1646 = sbr.rel (%p1644) target = $region76
        $region75: #{tpu_custom_call.1} parent=71 // pred_region
          %s1647 = smul.u32 8, %s32
          %p1648 = scmp.lt.s32.totalorder %s31, 1
          %s1649 = scalar_select %p1648, %s31, 1
          %p1650 = scmp.lt.s32.totalorder %s1647, 31
          %s1651 = scalar_select %p1650, %s1647, 31
          %s1652 = smul.addr %s1651, 2
          %s1653 = smul.addr %s1649, 64
          %s1654 = sadd.s32 %s1652, %s1653
          %s1655 = smul.addr %s1654, 8
          %s1656 = scalar_lea.vmem %s8, %s1655
        $region76: #{tpu_custom_call.1} parent=71 // pred_fallthru
          _
      $region72: #{tpu_custom_call.1} parent=5 // pred_fallthru
        _
    $region6: #{tpu_custom_call.1} parent=1 // loop_footer
      %s24 = sadd.s32 1, %s20
    $region7: #{tpu_custom_call.1} parent=1 // loop_footer_branch
      %19 = sbr.rel target = $region3
    $region8: #{tpu_custom_call.1} parent=1 // loop_exit
      _
    %1657 = vsyncpa [#allocation3], 1
    %s1658 = scalar_lea.sflag [#allocation3], 1
    %1659 = vsyncpa %s1658, 1
    %1660 = vsyncpa [#allocation5], 1
    %s1661 = scalar_lea.sflag [#allocation5], 1
    %1662 = vsyncpa %s1661, 1

</llo_original>
